<compile_context>
chip_gen: v7x
topology: tpu7x:2x2x1
jax: 0.10.0
libtpu: 0.0.40
codegen_flags: <defaults>
</compile_context>

<pallas_src>
import functools
import math

import jax
import jax.numpy as jnp
from jax.experimental import pallas as pl
from jax.experimental.pallas import tpu as pltpu

# ---- small synthetic BERT config (real BERT-base: H=768, L=12, heads=12) ----
VOCAB = 100
TYPE_VOCAB = 2
MAX_POS = 16
HIDDEN = 32
NUM_HEADS = 4
HEAD_DIM = HIDDEN // NUM_HEADS
INTERMEDIATE = 64
NUM_LAYERS = 2
LN_EPS = 1e-12


# ----------------------------- in-kernel helpers -----------------------------
def _layernorm(x, g, b, eps):
    mu = jnp.mean(x, axis=-1, keepdims=True)
    var = jnp.mean((x - mu) ** 2, axis=-1, keepdims=True)
    return (x - mu) * jax.lax.rsqrt(var + eps) * g + b


def _gelu_tanh(x):
    # TODO(synk): HF BERT uses the exact erf GELU; tanh approximation drifts slightly.
    c = math.sqrt(2.0 / math.pi)
    return 0.5 * x * (1.0 + jnp.tanh(c * (x + 0.044715 * x * x * x)))


# ----------------------------- Pallas kernels --------------------------------
def embed_layernorm_kernel(x_ref, g_ref, b_ref, o_ref, *, eps):
    # LayerNorm without residual (no zero-slab DMA).
    o_ref[...] = _layernorm(x_ref[...], g_ref[...], b_ref[...], eps).astype(o_ref.dtype)


def encoder_layer_kernel(x_ref, mask_ref, wqkv_ref, bqkv_ref, wo_ref, bo_ref,
                         g1_ref, b1_ref, wi_ref, bi_ref, w2_ref, b2_ref,
                         g2_ref, b2b_ref, o_ref, *, num_heads, head_dim, eps):
    x = x_ref[0].astype(jnp.float32)          # [S, H]  (one batch element)
    m = mask_ref[0]                           # [1, S]  additive mask (0 / -1e4), f32
    h_dim = num_heads * head_dim
    scale = 1.0 / math.sqrt(head_dim)

    # --- fused Q/K/V projection: single [S, H] @ [H, 3H] MXU matmul ---
    qkv = jnp.dot(x, wqkv_ref[...], preferred_element_type=jnp.float32) + bqkv_ref[...]

    # --- per-head attention; head-merge fused into the output projection ---
    attn_out = jnp.zeros((x.shape[0], h_dim), jnp.float32)
    for h in range(num_heads):
        lo, hi = h * head_dim, (h + 1) * head_dim
        qh = qkv[:, lo:hi]
        kh = qkv[:, h_dim + lo:h_dim + hi]
        vh = qkv[:, 2 * h_dim + lo:2 * h_dim + hi]
        s = jnp.dot(qh, kh.T, preferred_element_type=jnp.float32) * scale + m
        s = s - jnp.max(s, axis=-1, keepdims=True)
        p = jnp.exp(s)
        p = p * pl.reciprocal(jnp.sum(p, axis=-1, keepdims=True), approx=True)
        ctx_h = jnp.dot(p, vh, preferred_element_type=jnp.float32)
        attn_out = attn_out + jnp.dot(ctx_h, wo_ref[lo:hi, :],
                                      preferred_element_type=jnp.float32)
    attn_out = attn_out + bo_ref[...]

    # --- residual + LayerNorm 1 ---
    x1 = _layernorm(attn_out + x, g1_ref[...], b1_ref[...], eps)

    # --- feed-forward (GELU) + residual + LayerNorm 2 ---
    hid = jnp.dot(x1, wi_ref[...], preferred_element_type=jnp.float32) + bi_ref[...]
    hid = _gelu_tanh(hid)
    ff = jnp.dot(hid, w2_ref[...], preferred_element_type=jnp.float32) + b2_ref[...]
    x2 = _layernorm(ff + x1, g2_ref[...], b2b_ref[...], eps)

    o_ref[0] = x2.astype(o_ref.dtype)


def head_kernel(cls_ref, pw_ref, pb_ref, ow_ref, ob_ref, o_ref):
    pooled = jnp.tanh(jnp.dot(cls_ref[...], pw_ref[...],
                              preferred_element_type=jnp.float32) + pb_ref[...])
    # bert_drop = nn.Dropout(p=0.3): identity at inference time.
    out = jnp.dot(pooled, ow_ref[...], preferred_element_type=jnp.float32) + ob_ref[...]
    o_ref[...] = out.astype(o_ref.dtype)


# ----------------------------- Pallas wrappers -------------------------------
def embed_layernorm(x, g, b, eps=LN_EPS):
    M, H = x.shape
    return pl.pallas_call(
        functools.partial(embed_layernorm_kernel, eps=eps),
        out_shape=jax.ShapeDtypeStruct((M, H), x.dtype),
        grid=(1,),
        in_specs=[pl.BlockSpec((M, H), lambda i: (0, 0)),
                  pl.BlockSpec((1, H), lambda i: (0, 0)),
                  pl.BlockSpec((1, H), lambda i: (0, 0))],
        out_specs=pl.BlockSpec((M, H), lambda i: (0, 0)),
    )(x, g, b)


def encoder_layer(x, add_mask, layer):
    # x: [B, S, H]; add_mask: [B, 1, S]. One fused kernel per layer, grid over batch.
    B, S, H = x.shape

    def full(shape):
        nd = len(shape)
        return pl.BlockSpec(shape, lambda b, _nd=nd: (0,) * _nd)

    kern = functools.partial(encoder_layer_kernel, num_heads=NUM_HEADS,
                             head_dim=HEAD_DIM, eps=LN_EPS)
    return pl.pallas_call(
        kern,
        out_shape=jax.ShapeDtypeStruct((B, S, H), x.dtype),
        grid=(B,),
        in_specs=[
            pl.BlockSpec((1, S, H), lambda b: (b, 0, 0)),     # activations
            pl.BlockSpec((1, 1, S), lambda b: (b, 0, 0)),     # additive mask (per batch)
            full((H, 3 * H)), full((1, 3 * H)),               # fused QKV
            full((H, H)), full((1, H)),                       # attn output proj
            full((1, H)), full((1, H)),                       # LN1 gamma/beta
            full((H, INTERMEDIATE)), full((1, INTERMEDIATE)), # FFN in
            full((INTERMEDIATE, H)), full((1, H)),            # FFN out
            full((1, H)), full((1, H)),                       # LN2 gamma/beta
        ],
        out_specs=pl.BlockSpec((1, S, H), lambda b: (b, 0, 0)),
        compiler_params=pltpu.CompilerParams(
            dimension_semantics=("parallel",)),
    )(x, add_mask,
      layer["qkv_w"], layer["qkv_b"], layer["o_w"], layer["o_b"],
      layer["ln1_g"], layer["ln1_b"], layer["fc1_w"], layer["fc1_b"],
      layer["fc2_w"], layer["fc2_b"], layer["ln2_g"], layer["ln2_b"])


def classifier_head(cls, pw, pb, ow, ob):
    B, H = cls.shape
    return pl.pallas_call(
        head_kernel,
        out_shape=jax.ShapeDtypeStruct((B, 1), cls.dtype),
        grid=(1,),
        in_specs=[pl.BlockSpec((B, H), lambda i: (0, 0)),
                  pl.BlockSpec((H, H), lambda i: (0, 0)),
                  pl.BlockSpec((1, H), lambda i: (0, 0)),
                  pl.BlockSpec((H, 1), lambda i: (0, 0)),
                  pl.BlockSpec((1, 1), lambda i: (0, 0))],
        out_specs=pl.BlockSpec((B, 1), lambda i: (0, 0)),
    )(cls, pw, pb, ow, ob)


# ----------------------------- parameters ------------------------------------
def init_params(key):
    def nrm(k, shape):
        return jax.random.normal(k, shape, jnp.float32) * 0.02

    keys = iter(jax.random.split(key, 8 + 16 * NUM_LAYERS))
    params = {
        "word_emb": nrm(next(keys), (VOCAB, HIDDEN)),
        "pos_emb": nrm(next(keys), (MAX_POS, HIDDEN)),
        "type_emb": nrm(next(keys), (TYPE_VOCAB, HIDDEN)),
        "emb_ln_g": jnp.ones((1, HIDDEN), jnp.float32),
        "emb_ln_b": jnp.zeros((1, HIDDEN), jnp.float32),
        "pool_w": nrm(next(keys), (HIDDEN, HIDDEN)),
        "pool_b": jnp.zeros((1, HIDDEN), jnp.float32),
        "out_w": nrm(next(keys), (HIDDEN, 1)),   # nn.Linear(768, 1) analogue
        "out_b": jnp.zeros((1, 1), jnp.float32),
        "layers": [],
    }
    for _ in range(NUM_LAYERS):
        layer = {
            # Q/K/V projections stored pre-concatenated: one [H, 3H] matmul.
            "qkv_w": nrm(next(keys), (HIDDEN, 3 * HIDDEN)),
            "qkv_b": jnp.zeros((1, 3 * HIDDEN), jnp.float32),
            "o_w": nrm(next(keys), (HIDDEN, HIDDEN)),
            "o_b": jnp.zeros((1, HIDDEN), jnp.float32),
            "ln1_g": jnp.ones((1, HIDDEN), jnp.float32),
            "ln1_b": jnp.zeros((1, HIDDEN), jnp.float32),
            "fc1_w": nrm(next(keys), (HIDDEN, INTERMEDIATE)),
            "fc1_b": jnp.zeros((1, INTERMEDIATE), jnp.float32),
            "fc2_w": nrm(next(keys), (INTERMEDIATE, HIDDEN)),
            "fc2_b": jnp.zeros((1, HIDDEN), jnp.float32),
            "ln2_g": jnp.ones((1, HIDDEN), jnp.float32),
            "ln2_b": jnp.zeros((1, HIDDEN), jnp.float32),
        }
        params["layers"].append(layer)
    return params


# ----------------------------- forward ----------------------------------------
def forward(params, ids, mask, token_type_ids):
    B, S = ids.shape
    H = HIDDEN
    assert S <= MAX_POS, "sequence length exceeds position embedding table"

    # Embedding gathers are glue (XLA); LayerNorm (no residual) is Pallas.
    emb = (jnp.take(params["word_emb"], ids, axis=0)
           + params["pos_emb"][None, :S, :]
           + jnp.take(params["type_emb"], token_type_ids, axis=0))
    x = embed_layernorm(emb.reshape(B * S, H),
                        params["emb_ln_g"], params["emb_ln_b"]).reshape(B, S, H)
    # TODO(synk): embedding / attention / hidden dropout are identity in eval mode.

    # Additive mask in f32 (kept f32 through softmax even if matmuls go bf16 later).
    add_mask = ((1.0 - mask.astype(jnp.float32)) * -10000.0).reshape(B, 1, S)

    for layer in params["layers"]:
        x = encoder_layer(x, add_mask, layer)

    cls = x[:, 0, :]                                           # [CLS] token, [B, H]
    # pooler(tanh) + dropout(identity) + Linear(H, 1) fused into one tiny call.
    out = classifier_head(cls, params["pool_w"], params["pool_b"],
                          params["out_w"], params["out_b"])    # [B, 1]
    return out


if __name__ == "__main__":
    key = jax.random.PRNGKey(0)
    pkey, ikey = jax.random.split(key)
    params = init_params(pkey)

    B, S = 2, 8
    ids = jax.random.randint(ikey, (B, S), 0, VOCAB, dtype=jnp.int32)
    mask = jnp.ones((B, S), jnp.int32).at[1, 6:].set(0)         # pad last 2 of batch 1
    token_type_ids = jnp.zeros((B, S), jnp.int32).at[:, 4:].set(1)

    out = jax.jit(forward)(params, ids, mask, token_type_ids)
    out = jax.block_until_ready(out)
    assert out.shape == (B, 1) and out.dtype == jnp.float32
    print("KERNEL_OK")
</pallas_src>

<mosaic_0001>
module attributes {stable_mosaic.version = 11 : i64} {
  func.func @embed_layernorm_kernel(%arg0: i32, %arg1: memref<16x32xf32, #tpu.memory_space<vmem>>, %arg2: memref<1x32xf32, #tpu.memory_space<vmem>>, %arg3: memref<1x32xf32, #tpu.memory_space<vmem>>, %arg4: memref<16x32xf32, #tpu.memory_space<vmem>>) attributes {dimension_semantics = [#tpu.dimension_semantics<arbitrary>], iteration_bounds = array<i64: 1>, scalar_prefetch = 0 : i64, scratch_operands = 0 : i64, tpu.core_type = #tpu.core_type<tc>, window_params = [{pipeline_mode = #tpu.pipeline_mode<synchronous>, transform_indices = @transform_0, window_bounds = array<i64: 16, 32>}, {pipeline_mode = #tpu.pipeline_mode<synchronous>, transform_indices = @transform_1, window_bounds = array<i64: 1, 32>}, {pipeline_mode = #tpu.pipeline_mode<synchronous>, transform_indices = @transform_2, window_bounds = array<i64: 1, 32>}, {pipeline_mode = #tpu.pipeline_mode<synchronous>, transform_indices = @transform_3, window_bounds = array<i64: 16, 32>}]} {
    %c0 = arith.constant 0 : index
    %c0_0 = arith.constant 0 : index
    %0 = vector.load %arg1[%c0, %c0_0] : memref<16x32xf32, #tpu.memory_space<vmem>>, vector<16x32xf32>
    %c0_1 = arith.constant 0 : index
    %c0_2 = arith.constant 0 : index
    %1 = vector.load %arg2[%c0_1, %c0_2] : memref<1x32xf32, #tpu.memory_space<vmem>>, vector<1x32xf32>
    %c0_3 = arith.constant 0 : index
    %c0_4 = arith.constant 0 : index
    %2 = vector.load %arg3[%c0_3, %c0_4] : memref<1x32xf32, #tpu.memory_space<vmem>>, vector<1x32xf32>
    %cst = arith.constant dense<0.000000e+00> : vector<16xf32>
    %3 = vector.multi_reduction <add>, %0, %cst [1] : vector<16x32xf32> to vector<16xf32>
    %4 = vector.shape_cast %3 : vector<16xf32> to vector<16x1xf32>
    %cst_5 = arith.constant 3.200000e+01 : f32
    %5 = vector.broadcast %cst_5 : f32 to vector<16x1xf32>
    %6 = arith.divf %4, %5 : vector<16x1xf32>
    %7 = vector.broadcast %6 : vector<16x1xf32> to vector<16x32xf32>
    %8 = arith.subf %0, %7 : vector<16x32xf32>
    %9 = arith.mulf %8, %8 : vector<16x32xf32>
    %cst_6 = arith.constant dense<0.000000e+00> : vector<16xf32>
    %10 = vector.multi_reduction <add>, %9, %cst_6 [1] : vector<16x32xf32> to vector<16xf32>
    %11 = vector.shape_cast %10 : vector<16xf32> to vector<16x1xf32>
    %cst_7 = arith.constant 3.200000e+01 : f32
    %12 = vector.broadcast %cst_7 : f32 to vector<16x1xf32>
    %13 = arith.divf %11, %12 : vector<16x1xf32>
    %14 = vector.broadcast %6 : vector<16x1xf32> to vector<16x32xf32>
    %15 = arith.subf %0, %14 : vector<16x32xf32>
    %cst_8 = arith.constant 9.99999996E-13 : f32
    %16 = vector.broadcast %cst_8 : f32 to vector<16x1xf32>
    %17 = arith.addf %13, %16 : vector<16x1xf32>
    %18 = math.rsqrt %17 : vector<16x1xf32>
    %19 = vector.broadcast %18 : vector<16x1xf32> to vector<16x32xf32>
    %20 = arith.mulf %15, %19 : vector<16x32xf32>
    %21 = vector.broadcast %1 : vector<1x32xf32> to vector<16x32xf32>
    %22 = arith.mulf %20, %21 : vector<16x32xf32>
    %23 = vector.broadcast %2 : vector<1x32xf32> to vector<16x32xf32>
    %24 = arith.addf %22, %23 : vector<16x32xf32>
    %c0_9 = arith.constant 0 : index
    %c0_10 = arith.constant 0 : index
    %25 = vector.load %arg4[%c0_9, %c0_10] : memref<16x32xf32, #tpu.memory_space<vmem>>, vector<16x32xf32>
    tpu.vector_store %arg4[%c0_9, %c0_10], %24 {strides = array<i32>} : memref<16x32xf32, #tpu.memory_space<vmem>>, vector<16x32xf32>,
    return
  }
  func.func @transform_0(%arg0: i32) -> (i32, i32) {
    %c0_i32 = arith.constant 0 : i32
    %c0_i32_0 = arith.constant 0 : i32
    %c0_i32_1 = arith.constant 0 : i32
    return %c0_i32, %c0_i32_0 : i32, i32
  }
  func.func @transform_1(%arg0: i32) -> (i32, i32) {
    %c0_i32 = arith.constant 0 : i32
    %c0_i32_0 = arith.constant 0 : i32
    %c0_i32_1 = arith.constant 0 : i32
    return %c0_i32, %c0_i32_0 : i32, i32
  }
  func.func @transform_2(%arg0: i32) -> (i32, i32) {
    %c0_i32 = arith.constant 0 : i32
    %c0_i32_0 = arith.constant 0 : i32
    %c0_i32_1 = arith.constant 0 : i32
    return %c0_i32, %c0_i32_0 : i32, i32
  }
  func.func @transform_3(%arg0: i32) -> (i32, i32) {
    %c0_i32 = arith.constant 0 : i32
    %c0_i32_0 = arith.constant 0 : i32
    %c0_i32_1 = arith.constant 0 : i32
    return %c0_i32, %c0_i32_0 : i32, i32
  }
}

module attributes {stable_mosaic.version = 11 : i64} {
  func.func @encoder_layer_kernel(%arg0: i32, %arg1: memref<1x8x32xf32, #tpu.memory_space<vmem>>, %arg2: memref<1x1x8xf32, #tpu.memory_space<vmem>>, %arg3: memref<32x96xf32, #tpu.memory_space<vmem>>, %arg4: memref<1x96xf32, #tpu.memory_space<vmem>>, %arg5: memref<32x32xf32, #tpu.memory_space<vmem>>, %arg6: memref<1x32xf32, #tpu.memory_space<vmem>>, %arg7: memref<1x32xf32, #tpu.memory_space<vmem>>, %arg8: memref<1x32xf32, #tpu.memory_space<vmem>>, %arg9: memref<32x64xf32, #tpu.memory_space<vmem>>, %arg10: memref<1x64xf32, #tpu.memory_space<vmem>>, %arg11: memref<64x32xf32, #tpu.memory_space<vmem>>, %arg12: memref<1x32xf32, #tpu.memory_space<vmem>>, %arg13: memref<1x32xf32, #tpu.memory_space<vmem>>, %arg14: memref<1x32xf32, #tpu.memory_space<vmem>>, %arg15: memref<1x8x32xf32, #tpu.memory_space<vmem>>) attributes {dimension_semantics = [#tpu.dimension_semantics<parallel>], iteration_bounds = array<i64: 2>, scalar_prefetch = 0 : i64, scratch_operands = 0 : i64, tpu.core_type = #tpu.core_type<tc>, window_params = [{transform_indices = @transform_0, window_bounds = array<i64: 1, 8, 32>}, {transform_indices = @transform_1, window_bounds = array<i64: 1, 1, 8>}, {pipeline_mode = #tpu.pipeline_mode<synchronous>, transform_indices = @transform_2, window_bounds = array<i64: 32, 96>}, {pipeline_mode = #tpu.pipeline_mode<synchronous>, transform_indices = @transform_3, window_bounds = array<i64: 1, 96>}, {pipeline_mode = #tpu.pipeline_mode<synchronous>, transform_indices = @transform_4, window_bounds = array<i64: 32, 32>}, {pipeline_mode = #tpu.pipeline_mode<synchronous>, transform_indices = @transform_5, window_bounds = array<i64: 1, 32>}, {pipeline_mode = #tpu.pipeline_mode<synchronous>, transform_indices = @transform_6, window_bounds = array<i64: 1, 32>}, {pipeline_mode = #tpu.pipeline_mode<synchronous>, transform_indices = @transform_7, window_bounds = array<i64: 1, 32>}, {pipeline_mode = #tpu.pipeline_mode<synchronous>, transform_indices = @transform_8, window_bounds = array<i64: 32, 64>}, {pipeline_mode = #tpu.pipeline_mode<synchronous>, transform_indices = @transform_9, window_bounds = array<i64: 1, 64>}, {pipeline_mode = #tpu.pipeline_mode<synchronous>, transform_indices = @transform_10, window_bounds = array<i64: 64, 32>}, {pipeline_mode = #tpu.pipeline_mode<synchronous>, transform_indices = @transform_11, window_bounds = array<i64: 1, 32>}, {pipeline_mode = #tpu.pipeline_mode<synchronous>, transform_indices = @transform_12, window_bounds = array<i64: 1, 32>}, {pipeline_mode = #tpu.pipeline_mode<synchronous>, transform_indices = @transform_13, window_bounds = array<i64: 1, 32>}, {transform_indices = @transform_14, window_bounds = array<i64: 1, 8, 32>}]} {
    %c0 = arith.constant 0 : index
    %c0_0 = arith.constant 0 : index
    %c0_1 = arith.constant 0 : index
    %0 = vector.load %arg1[%c0, %c0_0, %c0_1] : memref<1x8x32xf32, #tpu.memory_space<vmem>>, vector<1x8x32xf32>
    %1 = vector.shape_cast %0 : vector<1x8x32xf32> to vector<8x32xf32>
    %c0_2 = arith.constant 0 : index
    %c0_3 = arith.constant 0 : index
    %c0_4 = arith.constant 0 : index
    %2 = vector.load %arg2[%c0_2, %c0_3, %c0_4] : memref<1x1x8xf32, #tpu.memory_space<vmem>>, vector<1x1x8xf32>
    %3 = vector.shape_cast %2 : vector<1x1x8xf32> to vector<1x8xf32>
    %c0_5 = arith.constant 0 : index
    %c0_6 = arith.constant 0 : index
    %4 = vector.load %arg3[%c0_5, %c0_6] : memref<32x96xf32, #tpu.memory_space<vmem>>, vector<32x96xf32>
    %cst = arith.constant dense<0.000000e+00> : vector<8x96xf32>
    %5 = tpu.matmul %1, %4, %cst {dimension_numbers = #tpu.dot_dimension_numbers<[1], [0], [0], [1], [0, 0, 1, 1], [], []>} : vector<8x32xf32>, vector<32x96xf32>, vector<8x96xf32> -> vector<8x96xf32>
    %c0_7 = arith.constant 0 : index
    %c0_8 = arith.constant 0 : index
    %6 = vector.load %arg4[%c0_7, %c0_8] : memref<1x96xf32, #tpu.memory_space<vmem>>, vector<1x96xf32>
    %7 = vector.broadcast %6 : vector<1x96xf32> to vector<8x96xf32>
    %8 = arith.addf %5, %7 : vector<8x96xf32>
    %cst_9 = arith.constant 0.000000e+00 : f32
    %9 = vector.broadcast %cst_9 : f32 to vector<8x32xf32>
    %10 = vector.extract_strided_slice %8 {offsets = [0, 0], sizes = [8, 8], strides = [1, 1]} : vector<8x96xf32> to vector<8x8xf32>
    %11 = vector.extract_strided_slice %8 {offsets = [0, 32], sizes = [8, 8], strides = [1, 1]} : vector<8x96xf32> to vector<8x8xf32>
    %12 = vector.extract_strided_slice %8 {offsets = [0, 64], sizes = [8, 8], strides = [1, 1]} : vector<8x96xf32> to vector<8x8xf32>
    %13 = tpu.transpose %11, [1, 0] : vector<8x8xf32> -> vector<8x8xf32>
    %cst_10 = arith.constant dense<0.000000e+00> : vector<8x8xf32>
    %14 = tpu.matmul %10, %13, %cst_10 {dimension_numbers = #tpu.dot_dimension_numbers<[1], [0], [0], [1], [0, 0, 1, 1], [], []>} : vector<8x8xf32>, vector<8x8xf32>, vector<8x8xf32> -> vector<8x8xf32>
    %cst_11 = arith.constant 0.353553385 : f32
    %15 = vector.broadcast %cst_11 : f32 to vector<8x8xf32>
    %16 = arith.mulf %14, %15 : vector<8x8xf32>
    %17 = vector.broadcast %3 : vector<1x8xf32> to vector<8x8xf32>
    %18 = arith.addf %16, %17 : vector<8x8xf32>
    %cst_12 = arith.constant dense<0xFF800000> : vector<8xf32>
    %19 = vector.multi_reduction <maximumf>, %18, %cst_12 [1] : vector<8x8xf32> to vector<8xf32>
    %20 = vector.shape_cast %19 : vector<8xf32> to vector<8x1xf32>
    %21 = vector.broadcast %20 : vector<8x1xf32> to vector<8x8xf32>
    %22 = arith.subf %18, %21 : vector<8x8xf32>
    %23 = math.exp %22 : vector<8x8xf32>
    %cst_13 = arith.constant dense<0.000000e+00> : vector<8xf32>
    %24 = vector.multi_reduction <add>, %23, %cst_13 [1] : vector<8x8xf32> to vector<8xf32>
    %25 = vector.shape_cast %24 : vector<8xf32> to vector<8x1xf32>
    %26 = tpu.reciprocal %25 {approx = true} : vector<8x1xf32> -> vector<8x1xf32>
    %27 = vector.broadcast %26 : vector<8x1xf32> to vector<8x8xf32>
    %28 = arith.mulf %23, %27 : vector<8x8xf32>
    %cst_14 = arith.constant dense<0.000000e+00> : vector<8x8xf32>
    %29 = tpu.matmul %28, %12, %cst_14 {dimension_numbers = #tpu.dot_dimension_numbers<[1], [0], [0], [1], [0, 0, 1, 1], [], []>} : vector<8x8xf32>, vector<8x8xf32>, vector<8x8xf32> -> vector<8x8xf32>
    %c0_15 = arith.constant 0 : index
    %c0_16 = arith.constant 0 : index
    %30 = vector.load %arg5[%c0_15, %c0_16] : memref<32x32xf32, #tpu.memory_space<vmem>>, vector<8x32xf32>
    %cst_17 = arith.constant dense<0.000000e+00> : vector<8x32xf32>
    %31 = tpu.matmul %29, %30, %cst_17 {dimension_numbers = #tpu.dot_dimension_numbers<[1], [0], [0], [1], [0, 0, 1, 1], [], []>} : vector<8x8xf32>, vector<8x32xf32>, vector<8x32xf32> -> vector<8x32xf32>
    %32 = arith.addf %9, %31 : vector<8x32xf32>
    %33 = vector.extract_strided_slice %8 {offsets = [0, 8], sizes = [8, 8], strides = [1, 1]} : vector<8x96xf32> to vector<8x8xf32>
    %34 = vector.extract_strided_slice %8 {offsets = [0, 40], sizes = [8, 8], strides = [1, 1]} : vector<8x96xf32> to vector<8x8xf32>
    %35 = vector.extract_strided_slice %8 {offsets = [0, 72], sizes = [8, 8], strides = [1, 1]} : vector<8x96xf32> to vector<8x8xf32>
    %36 = tpu.transpose %34, [1, 0] : vector<8x8xf32> -> vector<8x8xf32>
    %cst_18 = arith.constant dense<0.000000e+00> : vector<8x8xf32>
    %37 = tpu.matmul %33, %36, %cst_18 {dimension_numbers = #tpu.dot_dimension_numbers<[1], [0], [0], [1], [0, 0, 1, 1], [], []>} : vector<8x8xf32>, vector<8x8xf32>, vector<8x8xf32> -> vector<8x8xf32>
    %cst_19 = arith.constant 0.353553385 : f32
    %38 = vector.broadcast %cst_19 : f32 to vector<8x8xf32>
    %39 = arith.mulf %37, %38 : vector<8x8xf32>
    %40 = vector.broadcast %3 : vector<1x8xf32> to vector<8x8xf32>
    %41 = arith.addf %39, %40 : vector<8x8xf32>
    %cst_20 = arith.constant dense<0xFF800000> : vector<8xf32>
    %42 = vector.multi_reduction <maximumf>, %41, %cst_20 [1] : vector<8x8xf32> to vector<8xf32>
    %43 = vector.shape_cast %42 : vector<8xf32> to vector<8x1xf32>
    %44 = vector.broadcast %43 : vector<8x1xf32> to vector<8x8xf32>
    %45 = arith.subf %41, %44 : vector<8x8xf32>
    %46 = math.exp %45 : vector<8x8xf32>
    %cst_21 = arith.constant dense<0.000000e+00> : vector<8xf32>
    %47 = vector.multi_reduction <add>, %46, %cst_21 [1] : vector<8x8xf32> to vector<8xf32>
    %48 = vector.shape_cast %47 : vector<8xf32> to vector<8x1xf32>
    %49 = tpu.reciprocal %48 {approx = true} : vector<8x1xf32> -> vector<8x1xf32>
    %50 = vector.broadcast %49 : vector<8x1xf32> to vector<8x8xf32>
    %51 = arith.mulf %46, %50 : vector<8x8xf32>
    %cst_22 = arith.constant dense<0.000000e+00> : vector<8x8xf32>
    %52 = tpu.matmul %51, %35, %cst_22 {dimension_numbers = #tpu.dot_dimension_numbers<[1], [0], [0], [1], [0, 0, 1, 1], [], []>} : vector<8x8xf32>, vector<8x8xf32>, vector<8x8xf32> -> vector<8x8xf32>
    %c8 = arith.constant 8 : index
    %c0_23 = arith.constant 0 : index
    %53 = vector.load %arg5[%c8, %c0_23] : memref<32x32xf32, #tpu.memory_space<vmem>>, vector<8x32xf32>
    %cst_24 = arith.constant dense<0.000000e+00> : vector<8x32xf32>
    %54 = tpu.matmul %52, %53, %cst_24 {dimension_numbers = #tpu.dot_dimension_numbers<[1], [0], [0], [1], [0, 0, 1, 1], [], []>} : vector<8x8xf32>, vector<8x32xf32>, vector<8x32xf32> -> vector<8x32xf32>
    %55 = arith.addf %32, %54 : vector<8x32xf32>
    %56 = vector.extract_strided_slice %8 {offsets = [0, 16], sizes = [8, 8], strides = [1, 1]} : vector<8x96xf32> to vector<8x8xf32>
    %57 = vector.extract_strided_slice %8 {offsets = [0, 48], sizes = [8, 8], strides = [1, 1]} : vector<8x96xf32> to vector<8x8xf32>
    %58 = vector.extract_strided_slice %8 {offsets = [0, 80], sizes = [8, 8], strides = [1, 1]} : vector<8x96xf32> to vector<8x8xf32>
    %59 = tpu.transpose %57, [1, 0] : vector<8x8xf32> -> vector<8x8xf32>
    %cst_25 = arith.constant dense<0.000000e+00> : vector<8x8xf32>
    %60 = tpu.matmul %56, %59, %cst_25 {dimension_numbers = #tpu.dot_dimension_numbers<[1], [0], [0], [1], [0, 0, 1, 1], [], []>} : vector<8x8xf32>, vector<8x8xf32>, vector<8x8xf32> -> vector<8x8xf32>
    %cst_26 = arith.constant 0.353553385 : f32
    %61 = vector.broadcast %cst_26 : f32 to vector<8x8xf32>
    %62 = arith.mulf %60, %61 : vector<8x8xf32>
    %63 = vector.broadcast %3 : vector<1x8xf32> to vector<8x8xf32>
    %64 = arith.addf %62, %63 : vector<8x8xf32>
    %cst_27 = arith.constant dense<0xFF800000> : vector<8xf32>
    %65 = vector.multi_reduction <maximumf>, %64, %cst_27 [1] : vector<8x8xf32> to vector<8xf32>
    %66 = vector.shape_cast %65 : vector<8xf32> to vector<8x1xf32>
    %67 = vector.broadcast %66 : vector<8x1xf32> to vector<8x8xf32>
    %68 = arith.subf %64, %67 : vector<8x8xf32>
    %69 = math.exp %68 : vector<8x8xf32>
    %cst_28 = arith.constant dense<0.000000e+00> : vector<8xf32>
    %70 = vector.multi_reduction <add>, %69, %cst_28 [1] : vector<8x8xf32> to vector<8xf32>
    %71 = vector.shape_cast %70 : vector<8xf32> to vector<8x1xf32>
    %72 = tpu.reciprocal %71 {approx = true} : vector<8x1xf32> -> vector<8x1xf32>
    %73 = vector.broadcast %72 : vector<8x1xf32> to vector<8x8xf32>
    %74 = arith.mulf %69, %73 : vector<8x8xf32>
    %cst_29 = arith.constant dense<0.000000e+00> : vector<8x8xf32>
    %75 = tpu.matmul %74, %58, %cst_29 {dimension_numbers = #tpu.dot_dimension_numbers<[1], [0], [0], [1], [0, 0, 1, 1], [], []>} : vector<8x8xf32>, vector<8x8xf32>, vector<8x8xf32> -> vector<8x8xf32>
    %c16 = arith.constant 16 : index
    %c0_30 = arith.constant 0 : index
    %76 = vector.load %arg5[%c16, %c0_30] : memref<32x32xf32, #tpu.memory_space<vmem>>, vector<8x32xf32>
    %cst_31 = arith.constant dense<0.000000e+00> : vector<8x32xf32>
    %77 = tpu.matmul %75, %76, %cst_31 {dimension_numbers = #tpu.dot_dimension_numbers<[1], [0], [0], [1], [0, 0, 1, 1], [], []>} : vector<8x8xf32>, vector<8x32xf32>, vector<8x32xf32> -> vector<8x32xf32>
    %78 = arith.addf %55, %77 : vector<8x32xf32>
    %79 = vector.extract_strided_slice %8 {offsets = [0, 24], sizes = [8, 8], strides = [1, 1]} : vector<8x96xf32> to vector<8x8xf32>
    %80 = vector.extract_strided_slice %8 {offsets = [0, 56], sizes = [8, 8], strides = [1, 1]} : vector<8x96xf32> to vector<8x8xf32>
    %81 = vector.extract_strided_slice %8 {offsets = [0, 88], sizes = [8, 8], strides = [1, 1]} : vector<8x96xf32> to vector<8x8xf32>
    %82 = tpu.transpose %80, [1, 0] : vector<8x8xf32> -> vector<8x8xf32>
    %cst_32 = arith.constant dense<0.000000e+00> : vector<8x8xf32>
    %83 = tpu.matmul %79, %82, %cst_32 {dimension_numbers = #tpu.dot_dimension_numbers<[1], [0], [0], [1], [0, 0, 1, 1], [], []>} : vector<8x8xf32>, vector<8x8xf32>, vector<8x8xf32> -> vector<8x8xf32>
    %cst_33 = arith.constant 0.353553385 : f32
    %84 = vector.broadcast %cst_33 : f32 to vector<8x8xf32>
    %85 = arith.mulf %83, %84 : vector<8x8xf32>
    %86 = vector.broadcast %3 : vector<1x8xf32> to vector<8x8xf32>
    %87 = arith.addf %85, %86 : vector<8x8xf32>
    %cst_34 = arith.constant dense<0xFF800000> : vector<8xf32>
    %88 = vector.multi_reduction <maximumf>, %87, %cst_34 [1] : vector<8x8xf32> to vector<8xf32>
    %89 = vector.shape_cast %88 : vector<8xf32> to vector<8x1xf32>
    %90 = vector.broadcast %89 : vector<8x1xf32> to vector<8x8xf32>
    %91 = arith.subf %87, %90 : vector<8x8xf32>
    %92 = math.exp %91 : vector<8x8xf32>
    %cst_35 = arith.constant dense<0.000000e+00> : vector<8xf32>
    %93 = vector.multi_reduction <add>, %92, %cst_35 [1] : vector<8x8xf32> to vector<8xf32>
    %94 = vector.shape_cast %93 : vector<8xf32> to vector<8x1xf32>
    %95 = tpu.reciprocal %94 {approx = true} : vector<8x1xf32> -> vector<8x1xf32>
    %96 = vector.broadcast %95 : vector<8x1xf32> to vector<8x8xf32>
    %97 = arith.mulf %92, %96 : vector<8x8xf32>
    %cst_36 = arith.constant dense<0.000000e+00> : vector<8x8xf32>
    %98 = tpu.matmul %97, %81, %cst_36 {dimension_numbers = #tpu.dot_dimension_numbers<[1], [0], [0], [1], [0, 0, 1, 1], [], []>} : vector<8x8xf32>, vector<8x8xf32>, vector<8x8xf32> -> vector<8x8xf32>
    %c24 = arith.constant 24 : index
    %c0_37 = arith.constant 0 : index
    %99 = vector.load %arg5[%c24, %c0_37] : memref<32x32xf32, #tpu.memory_space<vmem>>, vector<8x32xf32>
    %cst_38 = arith.constant dense<0.000000e+00> : vector<8x32xf32>
    %100 = tpu.matmul %98, %99, %cst_38 {dimension_numbers = #tpu.dot_dimension_numbers<[1], [0], [0], [1], [0, 0, 1, 1], [], []>} : vector<8x8xf32>, vector<8x32xf32>, vector<8x32xf32> -> vector<8x32xf32>
    %101 = arith.addf %78, %100 : vector<8x32xf32>
    %c0_39 = arith.constant 0 : index
    %c0_40 = arith.constant 0 : index
    %102 = vector.load %arg6[%c0_39, %c0_40] : memref<1x32xf32, #tpu.memory_space<vmem>>, vector<1x32xf32>
    %103 = vector.broadcast %102 : vector<1x32xf32> to vector<8x32xf32>
    %104 = arith.addf %101, %103 : vector<8x32xf32>
    %105 = arith.addf %104, %1 : vector<8x32xf32>
    %c0_41 = arith.constant 0 : index
    %c0_42 = arith.constant 0 : index
    %106 = vector.load %arg7[%c0_41, %c0_42] : memref<1x32xf32, #tpu.memory_space<vmem>>, vector<1x32xf32>
    %c0_43 = arith.constant 0 : index
    %c0_44 = arith.constant 0 : index
    %107 = vector.load %arg8[%c0_43, %c0_44] : memref<1x32xf32, #tpu.memory_space<vmem>>, vector<1x32xf32>
    %cst_45 = arith.constant dense<0.000000e+00> : vector<8xf32>
    %108 = vector.multi_reduction <add>, %105, %cst_45 [1] : vector<8x32xf32> to vector<8xf32>
    %109 = vector.shape_cast %108 : vector<8xf32> to vector<8x1xf32>
    %cst_46 = arith.constant 3.200000e+01 : f32
    %110 = vector.broadcast %cst_46 : f32 to vector<8x1xf32>
    %111 = arith.divf %109, %110 : vector<8x1xf32>
    %112 = vector.broadcast %111 : vector<8x1xf32> to vector<8x32xf32>
    %113 = arith.subf %105, %112 : vector<8x32xf32>
    %114 = arith.mulf %113, %113 : vector<8x32xf32>
    %cst_47 = arith.constant dense<0.000000e+00> : vector<8xf32>
    %115 = vector.multi_reduction <add>, %114, %cst_47 [1] : vector<8x32xf32> to vector<8xf32>
    %116 = vector.shape_cast %115 : vector<8xf32> to vector<8x1xf32>
    %cst_48 = arith.constant 3.200000e+01 : f32
    %117 = vector.broadcast %cst_48 : f32 to vector<8x1xf32>
    %118 = arith.divf %116, %117 : vector<8x1xf32>
    %119 = vector.broadcast %111 : vector<8x1xf32> to vector<8x32xf32>
    %120 = arith.subf %105, %119 : vector<8x32xf32>
    %cst_49 = arith.constant 9.99999996E-13 : f32
    %121 = vector.broadcast %cst_49 : f32 to vector<8x1xf32>
    %122 = arith.addf %118, %121 : vector<8x1xf32>
    %123 = math.rsqrt %122 : vector<8x1xf32>
    %124 = vector.broadcast %123 : vector<8x1xf32> to vector<8x32xf32>
    %125 = arith.mulf %120, %124 : vector<8x32xf32>
    %126 = vector.broadcast %106 : vector<1x32xf32> to vector<8x32xf32>
    %127 = arith.mulf %125, %126 : vector<8x32xf32>
    %128 = vector.broadcast %107 : vector<1x32xf32> to vector<8x32xf32>
    %129 = arith.addf %127, %128 : vector<8x32xf32>
    %c0_50 = arith.constant 0 : index
    %c0_51 = arith.constant 0 : index
    %130 = vector.load %arg9[%c0_50, %c0_51] : memref<32x64xf32, #tpu.memory_space<vmem>>, vector<32x64xf32>
    %cst_52 = arith.constant dense<0.000000e+00> : vector<8x64xf32>
    %131 = tpu.matmul %129, %130, %cst_52 {dimension_numbers = #tpu.dot_dimension_numbers<[1], [0], [0], [1], [0, 0, 1, 1], [], []>} : vector<8x32xf32>, vector<32x64xf32>, vector<8x64xf32> -> vector<8x64xf32>
    %c0_53 = arith.constant 0 : index
    %c0_54 = arith.constant 0 : index
    %132 = vector.load %arg10[%c0_53, %c0_54] : memref<1x64xf32, #tpu.memory_space<vmem>>, vector<1x64xf32>
    %133 = vector.broadcast %132 : vector<1x64xf32> to vector<8x64xf32>
    %134 = arith.addf %131, %133 : vector<8x64xf32>
    %cst_55 = arith.constant 5.000000e-01 : f32
    %135 = vector.broadcast %cst_55 : f32 to vector<8x64xf32>
    %136 = arith.mulf %135, %134 : vector<8x64xf32>
    %cst_56 = arith.constant 4.471500e-02 : f32
    %137 = vector.broadcast %cst_56 : f32 to vector<8x64xf32>
    %138 = arith.mulf %137, %134 : vector<8x64xf32>
    %139 = arith.mulf %138, %134 : vector<8x64xf32>
    %140 = arith.mulf %139, %134 : vector<8x64xf32>
    %141 = arith.addf %134, %140 : vector<8x64xf32>
    %cst_57 = arith.constant 0.797884583 : f32
    %142 = vector.broadcast %cst_57 : f32 to vector<8x64xf32>
    %143 = arith.mulf %142, %141 : vector<8x64xf32>
    %144 = math.tanh %143 : vector<8x64xf32>
    %cst_58 = arith.constant 1.000000e+00 : f32
    %145 = vector.broadcast %cst_58 : f32 to vector<8x64xf32>
    %146 = arith.addf %145, %144 : vector<8x64xf32>
    %147 = arith.mulf %136, %146 : vector<8x64xf32>
    %c0_59 = arith.constant 0 : index
    %c0_60 = arith.constant 0 : index
    %148 = vector.load %arg11[%c0_59, %c0_60] : memref<64x32xf32, #tpu.memory_space<vmem>>, vector<64x32xf32>
    %cst_61 = arith.constant dense<0.000000e+00> : vector<8x32xf32>
    %149 = tpu.matmul %147, %148, %cst_61 {dimension_numbers = #tpu.dot_dimension_numbers<[1], [0], [0], [1], [0, 0, 1, 1], [], []>} : vector<8x64xf32>, vector<64x32xf32>, vector<8x32xf32> -> vector<8x32xf32>
    %c0_62 = arith.constant 0 : index
    %c0_63 = arith.constant 0 : index
    %150 = vector.load %arg12[%c0_62, %c0_63] : memref<1x32xf32, #tpu.memory_space<vmem>>, vector<1x32xf32>
    %151 = vector.broadcast %150 : vector<1x32xf32> to vector<8x32xf32>
    %152 = arith.addf %149, %151 : vector<8x32xf32>
    %153 = arith.addf %152, %129 : vector<8x32xf32>
    %c0_64 = arith.constant 0 : index
    %c0_65 = arith.constant 0 : index
    %154 = vector.load %arg13[%c0_64, %c0_65] : memref<1x32xf32, #tpu.memory_space<vmem>>, vector<1x32xf32>
    %c0_66 = arith.constant 0 : index
    %c0_67 = arith.constant 0 : index
    %155 = vector.load %arg14[%c0_66, %c0_67] : memref<1x32xf32, #tpu.memory_space<vmem>>, vector<1x32xf32>
    %cst_68 = arith.constant dense<0.000000e+00> : vector<8xf32>
    %156 = vector.multi_reduction <add>, %153, %cst_68 [1] : vector<8x32xf32> to vector<8xf32>
    %157 = vector.shape_cast %156 : vector<8xf32> to vector<8x1xf32>
    %cst_69 = arith.constant 3.200000e+01 : f32
    %158 = vector.broadcast %cst_69 : f32 to vector<8x1xf32>
    %159 = arith.divf %157, %158 : vector<8x1xf32>
    %160 = vector.broadcast %159 : vector<8x1xf32> to vector<8x32xf32>
    %161 = arith.subf %153, %160 : vector<8x32xf32>
    %162 = arith.mulf %161, %161 : vector<8x32xf32>
    %cst_70 = arith.constant dense<0.000000e+00> : vector<8xf32>
    %163 = vector.multi_reduction <add>, %162, %cst_70 [1] : vector<8x32xf32> to vector<8xf32>
    %164 = vector.shape_cast %163 : vector<8xf32> to vector<8x1xf32>
    %cst_71 = arith.constant 3.200000e+01 : f32
    %165 = vector.broadcast %cst_71 : f32 to vector<8x1xf32>
    %166 = arith.divf %164, %165 : vector<8x1xf32>
    %167 = vector.broadcast %159 : vector<8x1xf32> to vector<8x32xf32>
    %168 = arith.subf %153, %167 : vector<8x32xf32>
    %cst_72 = arith.constant 9.99999996E-13 : f32
    %169 = vector.broadcast %cst_72 : f32 to vector<8x1xf32>
    %170 = arith.addf %166, %169 : vector<8x1xf32>
    %171 = math.rsqrt %170 : vector<8x1xf32>
    %172 = vector.broadcast %171 : vector<8x1xf32> to vector<8x32xf32>
    %173 = arith.mulf %168, %172 : vector<8x32xf32>
    %174 = vector.broadcast %154 : vector<1x32xf32> to vector<8x32xf32>
    %175 = arith.mulf %173, %174 : vector<8x32xf32>
    %176 = vector.broadcast %155 : vector<1x32xf32> to vector<8x32xf32>
    %177 = arith.addf %175, %176 : vector<8x32xf32>
    %c0_73 = arith.constant 0 : index
    %c0_74 = arith.constant 0 : index
    %c0_75 = arith.constant 0 : index
    %178 = vector.load %arg15[%c0_73, %c0_74, %c0_75] : memref<1x8x32xf32, #tpu.memory_space<vmem>>, vector<1x8x32xf32>
    %179 = vector.shape_cast %178 : vector<1x8x32xf32> to vector<8x32xf32>
    %180 = vector.shape_cast %177 : vector<8x32xf32> to vector<1x8x32xf32>
    tpu.vector_store %arg15[%c0_73, %c0_74, %c0_75], %180 {strides = array<i32>} : memref<1x8x32xf32, #tpu.memory_space<vmem>>, vector<1x8x32xf32>,
    return
  }
  func.func @transform_0(%arg0: i32) -> (i32, i32, i32) {
    %c0_i32 = arith.constant 0 : i32
    %c0_i32_0 = arith.constant 0 : i32
    %c0_i32_1 = arith.constant 0 : i32
    return %arg0, %c0_i32, %c0_i32_0 : i32, i32, i32
  }
  func.func @transform_1(%arg0: i32) -> (i32, i32, i32) {
    %c0_i32 = arith.constant 0 : i32
    %c0_i32_0 = arith.constant 0 : i32
    %c0_i32_1 = arith.constant 0 : i32
    return %arg0, %c0_i32, %c0_i32_0 : i32, i32, i32
  }
  func.func @transform_2(%arg0: i32) -> (i32, i32) {
    %c0_i32 = arith.constant 0 : i32
    %c0_i32_0 = arith.constant 0 : i32
    %c0_i32_1 = arith.constant 0 : i32
    return %c0_i32, %c0_i32_0 : i32, i32
  }
  func.func @transform_3(%arg0: i32) -> (i32, i32) {
    %c0_i32 = arith.constant 0 : i32
    %c0_i32_0 = arith.constant 0 : i32
    %c0_i32_1 = arith.constant 0 : i32
    return %c0_i32, %c0_i32_0 : i32, i32
  }
  func.func @transform_4(%arg0: i32) -> (i32, i32) {
    %c0_i32 = arith.constant 0 : i32
    %c0_i32_0 = arith.constant 0 : i32
    %c0_i32_1 = arith.constant 0 : i32
    return %c0_i32, %c0_i32_0 : i32, i32
  }
  func.func @transform_5(%arg0: i32) -> (i32, i32) {
    %c0_i32 = arith.constant 0 : i32
    %c0_i32_0 = arith.constant 0 : i32
    %c0_i32_1 = arith.constant 0 : i32
    return %c0_i32, %c0_i32_0 : i32, i32
  }
  func.func @transform_6(%arg0: i32) -> (i32, i32) {
    %c0_i32 = arith.constant 0 : i32
    %c0_i32_0 = arith.constant 0 : i32
    %c0_i32_1 = arith.constant 0 : i32
    return %c0_i32, %c0_i32_0 : i32, i32
  }
  func.func @transform_7(%arg0: i32) -> (i32, i32) {
    %c0_i32 = arith.constant 0 : i32
    %c0_i32_0 = arith.constant 0 : i32
    %c0_i32_1 = arith.constant 0 : i32
    return %c0_i32, %c0_i32_0 : i32, i32
  }
  func.func @transform_8(%arg0: i32) -> (i32, i32) {
    %c0_i32 = arith.constant 0 : i32
    %c0_i32_0 = arith.constant 0 : i32
    %c0_i32_1 = arith.constant 0 : i32
    return %c0_i32, %c0_i32_0 : i32, i32
  }
  func.func @transform_9(%arg0: i32) -> (i32, i32) {
    %c0_i32 = arith.constant 0 : i32
    %c0_i32_0 = arith.constant 0 : i32
    %c0_i32_1 = arith.constant 0 : i32
    return %c0_i32, %c0_i32_0 : i32, i32
  }
  func.func @transform_10(%arg0: i32) -> (i32, i32) {
    %c0_i32 = arith.constant 0 : i32
    %c0_i32_0 = arith.constant 0 : i32
    %c0_i32_1 = arith.constant 0 : i32
    return %c0_i32, %c0_i32_0 : i32, i32
  }
  func.func @transform_11(%arg0: i32) -> (i32, i32) {
    %c0_i32 = arith.constant 0 : i32
    %c0_i32_0 = arith.constant 0 : i32
    %c0_i32_1 = arith.constant 0 : i32
    return %c0_i32, %c0_i32_0 : i32, i32
  }
  func.func @transform_12(%arg0: i32) -> (i32, i32) {
    %c0_i32 = arith.constant 0 : i32
    %c0_i32_0 = arith.constant 0 : i32
    %c0_i32_1 = arith.constant 0 : i32
    return %c0_i32, %c0_i32_0 : i32, i32
  }
  func.func @transform_13(%arg0: i32) -> (i32, i32) {
    %c0_i32 = arith.constant 0 : i32
    %c0_i32_0 = arith.constant 0 : i32
    %c0_i32_1 = arith.constant 0 : i32
    return %c0_i32, %c0_i32_0 : i32, i32
  }
  func.func @transform_14(%arg0: i32) -> (i32, i32, i32) {
    %c0_i32 = arith.constant 0 : i32
    %c0_i32_0 = arith.constant 0 : i32
    %c0_i32_1 = arith.constant 0 : i32
    return %arg0, %c0_i32, %c0_i32_0 : i32, i32, i32
  }
}

module attributes {stable_mosaic.version = 11 : i64} {
  func.func @head_kernel(%arg0: i32, %arg1: memref<2x32xf32, #tpu.memory_space<vmem>>, %arg2: memref<32x32xf32, #tpu.memory_space<vmem>>, %arg3: memref<1x32xf32, #tpu.memory_space<vmem>>, %arg4: memref<32x1xf32, #tpu.memory_space<vmem>>, %arg5: memref<1x1xf32, #tpu.memory_space<vmem>>, %arg6: memref<2x1xf32, #tpu.memory_space<vmem>>) attributes {dimension_semantics = [#tpu.dimension_semantics<arbitrary>], iteration_bounds = array<i64: 1>, scalar_prefetch = 0 : i64, scratch_operands = 0 : i64, tpu.core_type = #tpu.core_type<tc>, window_params = [{pipeline_mode = #tpu.pipeline_mode<synchronous>, transform_indices = @transform_0, window_bounds = array<i64: 2, 32>}, {pipeline_mode = #tpu.pipeline_mode<synchronous>, transform_indices = @transform_1, window_bounds = array<i64: 32, 32>}, {pipeline_mode = #tpu.pipeline_mode<synchronous>, transform_indices = @transform_2, window_bounds = array<i64: 1, 32>}, {pipeline_mode = #tpu.pipeline_mode<synchronous>, transform_indices = @transform_3, window_bounds = array<i64: 32, 1>}, {pipeline_mode = #tpu.pipeline_mode<synchronous>, transform_indices = @transform_4, window_bounds = array<i64: 1, 1>}, {pipeline_mode = #tpu.pipeline_mode<synchronous>, transform_indices = @transform_5, window_bounds = array<i64: 2, 1>}]} {
    %c0 = arith.constant 0 : index
    %c0_0 = arith.constant 0 : index
    %0 = vector.load %arg1[%c0, %c0_0] : memref<2x32xf32, #tpu.memory_space<vmem>>, vector<2x32xf32>
    %c0_1 = arith.constant 0 : index
    %c0_2 = arith.constant 0 : index
    %1 = vector.load %arg2[%c0_1, %c0_2] : memref<32x32xf32, #tpu.memory_space<vmem>>, vector<32x32xf32>
    %cst = arith.constant dense<0.000000e+00> : vector<2x32xf32>
    %2 = tpu.matmul %0, %1, %cst {dimension_numbers = #tpu.dot_dimension_numbers<[1], [0], [0], [1], [0, 0, 1, 1], [], []>} : vector<2x32xf32>, vector<32x32xf32>, vector<2x32xf32> -> vector<2x32xf32>
    %c0_3 = arith.constant 0 : index
    %c0_4 = arith.constant 0 : index
    %3 = vector.load %arg3[%c0_3, %c0_4] : memref<1x32xf32, #tpu.memory_space<vmem>>, vector<1x32xf32>
    %4 = vector.broadcast %3 : vector<1x32xf32> to vector<2x32xf32>
    %5 = arith.addf %2, %4 : vector<2x32xf32>
    %6 = math.tanh %5 : vector<2x32xf32>
    %c0_5 = arith.constant 0 : index
    %c0_6 = arith.constant 0 : index
    %7 = vector.load %arg4[%c0_5, %c0_6] : memref<32x1xf32, #tpu.memory_space<vmem>>, vector<32x1xf32>
    %cst_7 = arith.constant dense<0.000000e+00> : vector<2x1xf32>
    %8 = tpu.matmul %6, %7, %cst_7 {dimension_numbers = #tpu.dot_dimension_numbers<[1], [0], [0], [1], [0, 0, 1, 1], [], []>} : vector<2x32xf32>, vector<32x1xf32>, vector<2x1xf32> -> vector<2x1xf32>
    %c0_8 = arith.constant 0 : index
    %c0_9 = arith.constant 0 : index
    %9 = vector.load %arg5[%c0_8, %c0_9] : memref<1x1xf32, #tpu.memory_space<vmem>>, vector<1x1xf32>
    %10 = vector.broadcast %9 : vector<1x1xf32> to vector<2x1xf32>
    %11 = arith.addf %8, %10 : vector<2x1xf32>
    %c0_10 = arith.constant 0 : index
    %c0_11 = arith.constant 0 : index
    %12 = vector.load %arg6[%c0_10, %c0_11] : memref<2x1xf32, #tpu.memory_space<vmem>>, vector<2x1xf32>
    tpu.vector_store %arg6[%c0_10, %c0_11], %11 {strides = array<i32>} : memref<2x1xf32, #tpu.memory_space<vmem>>, vector<2x1xf32>,
    return
  }
  func.func @transform_0(%arg0: i32) -> (i32, i32) {
    %c0_i32 = arith.constant 0 : i32
    %c0_i32_0 = arith.constant 0 : i32
    %c0_i32_1 = arith.constant 0 : i32
    return %c0_i32, %c0_i32_0 : i32, i32
  }
  func.func @transform_1(%arg0: i32) -> (i32, i32) {
    %c0_i32 = arith.constant 0 : i32
    %c0_i32_0 = arith.constant 0 : i32
    %c0_i32_1 = arith.constant 0 : i32
    return %c0_i32, %c0_i32_0 : i32, i32
  }
  func.func @transform_2(%arg0: i32) -> (i32, i32) {
    %c0_i32 = arith.constant 0 : i32
    %c0_i32_0 = arith.constant 0 : i32
    %c0_i32_1 = arith.constant 0 : i32
    return %c0_i32, %c0_i32_0 : i32, i32
  }
  func.func @transform_3(%arg0: i32) -> (i32, i32) {
    %c0_i32 = arith.constant 0 : i32
    %c0_i32_0 = arith.constant 0 : i32
    %c0_i32_1 = arith.constant 0 : i32
    return %c0_i32, %c0_i32_0 : i32, i32
  }
  func.func @transform_4(%arg0: i32) -> (i32, i32) {
    %c0_i32 = arith.constant 0 : i32
    %c0_i32_0 = arith.constant 0 : i32
    %c0_i32_1 = arith.constant 0 : i32
    return %c0_i32, %c0_i32_0 : i32, i32
  }
  func.func @transform_5(%arg0: i32) -> (i32, i32) {
    %c0_i32 = arith.constant 0 : i32
    %c0_i32_0 = arith.constant 0 : i32
    %c0_i32_1 = arith.constant 0 : i32
    return %c0_i32, %c0_i32_0 : i32, i32
  }
}

</mosaic_0001>

<llo_original>
// kernel: forward.4
$region0: #{forward.4}
  #allocation0 [shape = 'u32[]', space=smem, size = 0x4, offset = 0x4, fixed_abs, tag = 'smem constant byte address 0x4 - core index']
  #allocation1 [shape = 'u32[144,128]{1,0:T(1,128)}', space=vmem, size = 0x12000, scoped, tag = 'internal scratch']
  %s0 = inlined_call_operand.vmem [shape: f32[16,32], index: 0, kind: input, shape index: {}]
  %s1 = inlined_call_operand.vmem [shape: f32[1,32], index: 1, kind: input, shape index: {}]
  %s2 = inlined_call_operand.vmem [shape: f32[1,32], index: 2, kind: input, shape index: {}]
  %s3 = inlined_call_operand.vmem [shape: f32[16,32], index: 3, kind: output, shape index: {}]
  %s4 = sld [smem:[#allocation0]]
  $region22: #{forward.4} parent=0
    _
  %s6 = ssub.s32 1, %s4
  %s7 = scalar_select 0, %s6, %s4
  // Predicated region
  $region2: #{forward.4} parent=0 // pred_check
    _
  $region3: #{forward.4} parent=0 // pred_check_branch
    %9 = sbr.rel (0) target = $region5
  $region4: #{forward.4} parent=0 // pred_region
    _
  $region5: #{forward.4} parent=0 // pred_fallthru
    _
  // Predicated region
  $region6: #{forward.4} parent=0 // pred_check
    _
  $region7: #{forward.4} parent=0 // pred_check_branch
    %11 = sbr.rel (0) target = $region9
  $region8: #{forward.4} parent=0 // pred_region
    _
  $region9: #{forward.4} parent=0 // pred_fallthru
    _
  // Predicated region
  $region10: #{forward.4} parent=0 // pred_check
    _
  $region11: #{forward.4} parent=0 // pred_check_branch
    %13 = sbr.rel (0) target = $region13
  $region12: #{forward.4} parent=0 // pred_region
    _
  $region13: #{forward.4} parent=0 // pred_fallthru
    _
  %v14 = vld [vmem:[%s0] sm:$0xff]
  %v15 = vld [vmem:[%s0 + $0x8] sm:$0xff]
  %v16 = vld [vmem:[%s1] sm:$0x1]
  %v17 = vld [vmem:[%s2] sm:$0x1]
  %vm18 = vcmask 261120
  %v19 = vsel %vm18, %v14, 0.0
  %20 = vadd.xlane.f32.xlu0 %v19
  %v21 = vpop.xlane.xlu0 %20
  %v22 = vsel %vm18, %v15, 0.0
  %23 = vadd.xlane.f32.xlu0 %v22
  %v24 = vpop.xlane.xlu0 %23
  %v25 = vrcp.pop 32.0
  %v26 = vmul.f32 %v21, %v25
  %v27 = vmul.f32 %v24, %v25
  %v28 = vsub.f32 %v14, %v26
  %v29 = vsub.f32 %v15, %v27
  %v30 = vmul.f32 %v28, %v28
  %v31 = vmul.f32 %v29, %v29
  %v32 = vsel %vm18, %v30, 0.0
  %33 = vadd.xlane.f32.xlu0 %v32
  %v34 = vpop.xlane.xlu0 %33
  %v35 = vsel %vm18, %v31, 0.0
  %36 = vadd.xlane.f32.xlu0 %v35
  %v37 = vpop.xlane.xlu0 %36
  %v38 = vmul.f32 %v34, %v25
  %v39 = vmul.f32 %v37, %v25
  %v40 = vadd.f32 %v38, 1e-12
  %v41 = vadd.f32 %v39, 1e-12
  %v42 = vrsqrt.pop %v40
  %v43 = vrsqrt.pop %v41
  %v44 = vmul.f32 %v28, %v42
  %v45 = vmul.f32 %v29, %v43
  %v47 = vlaneseq
  %v48 = vshrl.u32 %v47, 7
  %v49 = vsub.s32 0, %v48
  %v50 = vrot.slane %v16, %v49
  %v52 = vmul.f32 %v44, %v50
  %v53 = vmul.f32 %v45, %v50
  %v55 = vlaneseq
  %v56 = vshrl.u32 %v55, 7
  %v57 = vsub.s32 0, %v56
  %v58 = vrot.slane %v17, %v57
  %v60 = vadd.f32 %v52, %v58
  %v61 = vadd.f32 %v53, %v58
  %62 = vst.msk [vmem:[%s3] sm:$0xff] %vm18, %v60
  %63 = vst.msk [vmem:[%s3 + $0x8] sm:$0xff] %vm18, %v61
  // Predicated region
  $region14: #{forward.4} parent=0 // pred_check
    _
  $region15: #{forward.4} parent=0 // pred_check_branch
    %65 = sbr.rel (0) target = $region17
  $region16: #{forward.4} parent=0 // pred_region
    _
  $region17: #{forward.4} parent=0 // pred_fallthru
    _
  // Predicated region
  $region18: #{forward.4} parent=0 // pred_check
    _
  $region19: #{forward.4} parent=0 // pred_check_branch
    %67 = sbr.rel (0) target = $region21
  $region20: #{forward.4} parent=0 // pred_region
    _
  $region21: #{forward.4} parent=0 // pred_fallthru
    _

// kernel: forward.7
$region0: #{forward.7}
  #allocation0 [shape = 'u32[]', space=smem, size = 0x4, offset = 0x4, fixed_abs, tag = 'smem constant byte address 0x4 - core index']
  #allocation1 [shape = 'u32[144,128]{1,0:T(1,128)}', space=vmem, size = 0x12000, scoped, tag = 'internal scratch']
  #allocation2 [shape = 'f32[1,1]{1,0:T(1,128)S(1)}', space=vmem, size = 0x200, scoped, tag = 'scoped memory for forward.7']
  %s0 = inlined_call_operand.vmem [shape: f32[2,32], index: 0, kind: input, shape index: {}]
  %s1 = inlined_call_operand.vmem [shape: f32[32,32], index: 1, kind: input, shape index: {}]
  %s2 = inlined_call_operand.vmem [shape: f32[1,32], index: 2, kind: input, shape index: {}]
  %s3 = inlined_call_operand.vmem [shape: f32[32,1], index: 3, kind: input, shape index: {}]
  %s4 = inlined_call_operand.<no memory space> [shape: f32[1,1], index: 4, kind: input, shape index: {}]
  %s5 = inlined_call_operand.vmem [shape: f32[2,1], index: 5, kind: output, shape index: {}]
  %s6 = sld [smem:[#allocation0]]
  $region30: #{forward.7} parent=0
    _
  %s8 = ssub.s32 1, %s6
  %s9 = scalar_select 0, %s8, %s6
  %v10 = vstv %s4
  %11 = vst [vmem:[#allocation2] sm:$0x1] %v10
  // Predicated region
  $region2: #{forward.7} parent=0 // pred_check
    _
  $region3: #{forward.7} parent=0 // pred_check_branch
    %13 = sbr.rel (0) target = $region5
  $region4: #{forward.7} parent=0 // pred_region
    _
  $region5: #{forward.7} parent=0 // pred_fallthru
    _
  // Predicated region
  $region6: #{forward.7} parent=0 // pred_check
    _
  $region7: #{forward.7} parent=0 // pred_check_branch
    %15 = sbr.rel (0) target = $region9
  $region8: #{forward.7} parent=0 // pred_region
    _
  $region9: #{forward.7} parent=0 // pred_fallthru
    _
  // Predicated region
  $region10: #{forward.7} parent=0 // pred_check
    _
  $region11: #{forward.7} parent=0 // pred_check_branch
    %17 = sbr.rel (0) target = $region13
  $region12: #{forward.7} parent=0 // pred_region
    _
  $region13: #{forward.7} parent=0 // pred_fallthru
    _
  // Predicated region
  $region14: #{forward.7} parent=0 // pred_check
    _
  $region15: #{forward.7} parent=0 // pred_check_branch
    %19 = sbr.rel (0) target = $region17
  $region16: #{forward.7} parent=0 // pred_region
    _
  $region17: #{forward.7} parent=0 // pred_fallthru
    _
  // Predicated region
  $region18: #{forward.7} parent=0 // pred_check
    _
  $region19: #{forward.7} parent=0 // pred_check_branch
    %21 = sbr.rel (0) target = $region21
  $region20: #{forward.7} parent=0 // pred_region
    _
  $region21: #{forward.7} parent=0 // pred_fallthru
    _
  %v22 = vld [vmem:[%s0] sm:$0x3]
  %v23 = vld [vmem:[%s1] sm:$0xff]
  %v24 = vld [vmem:[%s1 + $0x8] sm:$0xff]
  %v25 = vld [vmem:[%s1 + $0x10] sm:$0xff]
  %v26 = vld [vmem:[%s1 + $0x18] sm:$0xff]
  %v27 = vld [vmem:[%s2] sm:$0x1]
  %v29 = vlaneseq
  %v30 = vshrl.u32 %v29, 7
  %v31 = vsub.s32 0, %v30
  %v32 = vrot.slane %v27, %v31
  %vm34 = vcmask 261120
  %v36 = vsel %vm34, %v22, 0
  %38 = vmatprep.subr.mxu0 0.0
  %39 = vmatpush1.msra.mxu0 %v23
  %40 = vmatprep.subr.mxu0 0.0
  %41 = vmatpush1.msra.mxu0 %v24
  %42 = vmatprep.subr.mxu0 0.0
  %43 = vmatpush1.msra.mxu0 %v25
  %44 = vmatprep.subr.mxu0 0.0
  %45 = vmatpush1.msra.mxu0 %v26
  %46 = vmatprep.subr.mxu0 0.0
  %47 = vmatpush1.msra.mxu0 0.0
  %48 = vmatprep.subr.mxu0 0.0
  %49 = vmatpush1.msra.mxu0 0.0
  %50 = vmatprep.subr.mxu0 0.0
  %51 = vmatpush1.msra.mxu0 0.0
  %52 = vmatprep.subr.mxu0 0.0
  %53 = vmatpush1.msra.mxu0 0.0
  %54 = vmatprep.subr.mxu0 0.0
  %55 = vmatpush1.msra.mxu0 0.0
  %56 = vmatprep.subr.mxu0 0.0
  %57 = vmatpush1.msra.mxu0 0.0
  %58 = vmatprep.subr.mxu0 0.0
  %59 = vmatpush1.msra.mxu0 0.0
  %60 = vmatprep.subr.mxu0 0.0
  %61 = vmatpush1.msra.mxu0 0.0
  %62 = vmatprep.subr.mxu0 0.0
  %63 = vmatpush1.msra.mxu0 0.0
  %64 = vmatprep.subr.mxu0 0.0
  %65 = vmatpush1.msra.mxu0 0.0
  %66 = vmatprep.subr.mxu0 0.0
  %67 = vmatpush1.msra.mxu0 0.0
  %68 = vmatprep.subr.mxu0 0.0
  %69 = vmatpush1.msra.mxu0 0.0
  %70 = vmatprep.subr.mxu0 0.0
  %71 = vmatpush1.msra.mxu0 0.0
  %72 = vmatprep.subr.mxu0 0.0
  %73 = vmatpush1.msra.mxu0 0.0
  %74 = vmatprep.subr.mxu0 0.0
  %75 = vmatpush1.msra.mxu0 0.0
  %76 = vmatprep.subr.mxu0 0.0
  %77 = vmatpush1.msra.mxu0 0.0
  %78 = vmatprep.subr.mxu0 0.0
  %79 = vmatpush1.msra.mxu0 0.0
  %80 = vmatprep.subr.mxu0 0.0
  %81 = vmatpush1.msra.mxu0 0.0
  %82 = vmatprep.subr.mxu0 0.0
  %83 = vmatpush1.msra.mxu0 0.0
  %84 = vmatprep.subr.mxu0 0.0
  %85 = vmatpush1.msra.mxu0 0.0
  %86 = vmatprep.subr.mxu0 0.0
  %87 = vmatpush1.msra.mxu0 0.0
  %88 = vmatprep.subr.mxu0 0.0
  %89 = vmatpush1.msra.mxu0 0.0
  %90 = vmatprep.subr.mxu0 0.0
  %91 = vmatpush1.msra.mxu0 0.0
  %92 = vmatprep.subr.mxu0 0.0
  %93 = vmatpush1.msra.mxu0 0.0
  %94 = vmatprep.subr.mxu0 0.0
  %95 = vmatpush1.msra.mxu0 0.0
  %96 = vmatprep.subr.mxu0 0.0
  %97 = vmatpush1.msra.mxu0 0.0
  %98 = vmatprep.subr.mxu0 0.0
  %99 = vmatpush1.msra.mxu0 0.0
  %100 = vmatprep.subr.mxu0 0.0
  %101 = vmatpush1.msra.mxu0 0.0
  %102 = vmatprep.mubr.f32.mxu0 0.0
  %103 = vmatmul.mubr.f32.gmra.mrb[0].mxu0 %v36
  %v104 = vpop.f32.mrb[0].mxu0
  %v105 = vadd.f32 %v32, %v104
  %v106 = vpop.f32.mrb[0].mxu0
  %107 = vdwg.mxu0
  %v108 = vtanh.pop %v105
  %v109 = vld [vmem:[%s3] sm:$0xff]
  %v110 = vld [vmem:[%s3 + $0x8] sm:$0xff]
  %v111 = vld [vmem:[%s3 + $0x10] sm:$0xff]
  %v112 = vld [vmem:[%s3 + $0x18] sm:$0xff]
  %v113 = vld [vmem:[#allocation2] sm:$0x1]
  %v115 = vlaneseq
  %v116 = vshrl.u32 %v115, 7
  %v117 = vsub.s32 0, %v116
  %v118 = vrot.slane %v113, %v117
  %v121 = vsel %vm34, %v108, 0
  %123 = vmatprep.subr.mxu0 0.0
  %124 = vmatpush1.msra.mxu0 %v109
  %125 = vmatprep.subr.mxu0 0.0
  %126 = vmatpush1.msra.mxu0 %v110
  %127 = vmatprep.subr.mxu0 0.0
  %128 = vmatpush1.msra.mxu0 %v111
  %129 = vmatprep.subr.mxu0 0.0
  %130 = vmatpush1.msra.mxu0 %v112
  %131 = vmatprep.subr.mxu0 0.0
  %132 = vmatpush1.msra.mxu0 0.0
  %133 = vmatprep.subr.mxu0 0.0
  %134 = vmatpush1.msra.mxu0 0.0
  %135 = vmatprep.subr.mxu0 0.0
  %136 = vmatpush1.msra.mxu0 0.0
  %137 = vmatprep.subr.mxu0 0.0
  %138 = vmatpush1.msra.mxu0 0.0
  %139 = vmatprep.subr.mxu0 0.0
  %140 = vmatpush1.msra.mxu0 0.0
  %141 = vmatprep.subr.mxu0 0.0
  %142 = vmatpush1.msra.mxu0 0.0
  %143 = vmatprep.subr.mxu0 0.0
  %144 = vmatpush1.msra.mxu0 0.0
  %145 = vmatprep.subr.mxu0 0.0
  %146 = vmatpush1.msra.mxu0 0.0
  %147 = vmatprep.subr.mxu0 0.0
  %148 = vmatpush1.msra.mxu0 0.0
  %149 = vmatprep.subr.mxu0 0.0
  %150 = vmatpush1.msra.mxu0 0.0
  %151 = vmatprep.subr.mxu0 0.0
  %152 = vmatpush1.msra.mxu0 0.0
  %153 = vmatprep.subr.mxu0 0.0
  %154 = vmatpush1.msra.mxu0 0.0
  %155 = vmatprep.subr.mxu0 0.0
  %156 = vmatpush1.msra.mxu0 0.0
  %157 = vmatprep.subr.mxu0 0.0
  %158 = vmatpush1.msra.mxu0 0.0
  %159 = vmatprep.subr.mxu0 0.0
  %160 = vmatpush1.msra.mxu0 0.0
  %161 = vmatprep.subr.mxu0 0.0
  %162 = vmatpush1.msra.mxu0 0.0
  %163 = vmatprep.subr.mxu0 0.0
  %164 = vmatpush1.msra.mxu0 0.0
  %165 = vmatprep.subr.mxu0 0.0
  %166 = vmatpush1.msra.mxu0 0.0
  %167 = vmatprep.subr.mxu0 0.0
  %168 = vmatpush1.msra.mxu0 0.0
  %169 = vmatprep.subr.mxu0 0.0
  %170 = vmatpush1.msra.mxu0 0.0
  %171 = vmatprep.subr.mxu0 0.0
  %172 = vmatpush1.msra.mxu0 0.0
  %173 = vmatprep.subr.mxu0 0.0
  %174 = vmatpush1.msra.mxu0 0.0
  %175 = vmatprep.subr.mxu0 0.0
  %176 = vmatpush1.msra.mxu0 0.0
  %177 = vmatprep.subr.mxu0 0.0
  %178 = vmatpush1.msra.mxu0 0.0
  %179 = vmatprep.subr.mxu0 0.0
  %180 = vmatpush1.msra.mxu0 0.0
  %181 = vmatprep.subr.mxu0 0.0
  %182 = vmatpush1.msra.mxu0 0.0
  %183 = vmatprep.subr.mxu0 0.0
  %184 = vmatpush1.msra.mxu0 0.0
  %185 = vmatprep.subr.mxu0 0.0
  %186 = vmatpush1.msra.mxu0 0.0
  %187 = vmatprep.mubr.f32.mxu0 0.0
  %188 = vmatmul.mubr.f32.gmra.mrb[0].mxu0 %v121
  %v189 = vpop.f32.mrb[0].mxu0
  %v190 = vadd.f32 %v118, %v189
  %v191 = vpop.f32.mrb[0].mxu0
  %192 = vdwg.mxu0
  %vm193 = vcmask 1024
  %194 = vst.msk [vmem:[%s5] sm:$0x3] %vm193, %v190
  // Predicated region
  $region22: #{forward.7} parent=0 // pred_check
    _
  $region23: #{forward.7} parent=0 // pred_check_branch
    %196 = sbr.rel (0) target = $region25
  $region24: #{forward.7} parent=0 // pred_region
    _
  $region25: #{forward.7} parent=0 // pred_fallthru
    _
  // Predicated region
  $region26: #{forward.7} parent=0 // pred_check
    _
  $region27: #{forward.7} parent=0 // pred_check_branch
    %198 = sbr.rel (0) target = $region29
  $region28: #{forward.7} parent=0 // pred_region
    _
  $region29: #{forward.7} parent=0 // pred_fallthru
    _

// kernel: forward.5
$region0: #{forward.5}
  #allocation0 [shape = 'u32[]', space=smem, size = 0x4, offset = 0x4, fixed_abs, tag = 'smem constant byte address 0x4 - core index']
  #allocation1 [shape = 'u32[144,128]{1,0:T(1,128)}', space=vmem, size = 0x12000, scoped, tag = 'internal scratch']
  %s0 = inlined_call_operand.vmem [shape: f32[2,8,32], index: 0, kind: input, shape index: {}]
  %s1 = inlined_call_operand.vmem [shape: f32[2,1,8], index: 1, kind: input, shape index: {}]
  %s2 = inlined_call_operand.vmem [shape: f32[32,96], index: 2, kind: input, shape index: {}]
  %s3 = inlined_call_operand.vmem [shape: f32[1,96], index: 3, kind: input, shape index: {}]
  %s4 = inlined_call_operand.vmem [shape: f32[32,32], index: 4, kind: input, shape index: {}]
  %s5 = inlined_call_operand.vmem [shape: f32[1,32], index: 5, kind: input, shape index: {}]
  %s6 = inlined_call_operand.vmem [shape: f32[1,32], index: 6, kind: input, shape index: {}]
  %s7 = inlined_call_operand.vmem [shape: f32[1,32], index: 7, kind: input, shape index: {}]
  %s8 = inlined_call_operand.vmem [shape: f32[32,64], index: 8, kind: input, shape index: {}]
  %s9 = inlined_call_operand.vmem [shape: f32[1,64], index: 9, kind: input, shape index: {}]
  %s10 = inlined_call_operand.vmem [shape: f32[64,32], index: 10, kind: input, shape index: {}]
  %s11 = inlined_call_operand.vmem [shape: f32[1,32], index: 11, kind: input, shape index: {}]
  %s12 = inlined_call_operand.vmem [shape: f32[1,32], index: 12, kind: input, shape index: {}]
  %s13 = inlined_call_operand.vmem [shape: f32[1,32], index: 13, kind: input, shape index: {}]
  %s14 = inlined_call_operand.vmem [shape: f32[2,8,32], index: 14, kind: output, shape index: {}]
  %s15 = sld [smem:[#allocation0]]
  $region89: #{forward.5} parent=0
    _
  %s17 = ssub.s32 1, %s15
  %s18 = scalar_select 0, %s17, %s15
  loop: start=0, step=1, limit=4
  $region2: #{forward.5} parent=0 // loop_pre_header
    _
  $region3: #{forward.5} parent=0 // loop_header
    %s20 = sphi 0, %s24
    %p21 = scmp.ge.s32.totalorder %s20, 4
    %s30 = sphi 0, %s32
    %s33 = sphi 0, %s30
    %s34 = sphi 0, %s33
    %s50 = sphi 0, %s34
    %s56 = sphi 0, %s58
    %s59 = sphi 0, %s56
    %s60 = sphi 0, %s59
    %s76 = sphi 0, %s60
    %s80 = sphi 0, %s80
    %s82 = sphi 0, %s80
    %s83 = sphi 0, %s82
    %s97 = sphi 0, %s83
    %s101 = sphi 0, %s101
    %s103 = sphi 0, %s101
    %s104 = sphi 0, %s103
    %s118 = sphi 0, %s104
    %s122 = sphi 0, %s122
    %s124 = sphi 0, %s122
    %s125 = sphi 0, %s124
    %s139 = sphi 0, %s125
    %s143 = sphi 0, %s143
    %s145 = sphi 0, %s143
    %s146 = sphi 0, %s145
    %s160 = sphi 0, %s146
    %s164 = sphi 0, %s164
    %s166 = sphi 0, %s164
    %s167 = sphi 0, %s166
    %s181 = sphi 0, %s167
    %s185 = sphi 0, %s185
    %s187 = sphi 0, %s185
    %s188 = sphi 0, %s187
    %s202 = sphi 0, %s188
    %s206 = sphi 0, %s206
    %s208 = sphi 0, %s206
    %s209 = sphi 0, %s208
    %s223 = sphi 0, %s209
    %s227 = sphi 0, %s227
    %s229 = sphi 0, %s227
    %s230 = sphi 0, %s229
    %s244 = sphi 0, %s230
    %s248 = sphi 0, %s248
    %s250 = sphi 0, %s248
    %s251 = sphi 0, %s250
    %s265 = sphi 0, %s251
    %s269 = sphi 0, %s269
    %s271 = sphi 0, %s269
    %s272 = sphi 0, %s271
    %s286 = sphi 0, %s272
    %s290 = sphi 0, %s290
    %s292 = sphi 0, %s290
    %s293 = sphi 0, %s292
    %s307 = sphi 0, %s293
    %s311 = sphi 0, %s311
    %s313 = sphi 0, %s311
    %s314 = sphi 0, %s313
    %s328 = sphi 0, %s314
    %s334 = sphi 0, %s336
    %s337 = sphi 0, %s334
    %s338 = sphi 0, %s337
    %s354 = sphi 0, %s338
  $region4: #{forward.5} parent=0 // loop_header_branch
    %23 = sbr.rel (%p21) target = $region8
  $region5: #{forward.5} parent=0 // loop_body
    %s25 = ssub.s32 %s20, 1
    %s26 = ssub.s32 %s20, 2
    %s27 = sadd.s32 %s20, 1
    %s28 = ssub.s32 %s20, %s27
    %p29 = scmp.eq.s32.totalorder %s28, 0
    %s31 = sadd.s32 %s30, 1
    %s32 = scalar_select %p29, %s30, %s31
    %p35 = pneg %p29
    %p36 = scmp.eq.s32.totalorder %s20, 1
    %p37 = por %p35, %p36
    %p38 = scmp.ne.s32.totalorder %s30, %s33
    %p39 = scmp.eq.s32.totalorder %s20, 0
    %p40 = por %p38, %p39
    %p41 = scmp.ne.s32.totalorder %s30, %s33
    %p42 = scmp.eq.s32.totalorder %s25, 1
    %p43 = por %p41, %p42
    %p44 = scmp.ne.s32.totalorder %s33, %s34
    %p45 = scmp.eq.s32.totalorder %s25, 0
    %p46 = por %p44, %p45
    %p47 = scmp.ne.s32.totalorder %s33, %s34
    %p48 = scmp.eq.s32.totalorder %s26, 1
    %p49 = por %p47, %p48
    %p51 = scmp.ne.s32.totalorder %s34, %s50
    %p52 = scmp.eq.s32.totalorder %s26, 0
    %p53 = por %p51, %p52
    %s54 = ssub.s32 %s20, %s27
    %p55 = scmp.eq.s32.totalorder %s54, 0
    %s57 = sadd.s32 %s56, 1
    %s58 = scalar_select %p55, %s56, %s57
    %p61 = pneg %p55
    %p62 = scmp.eq.s32.totalorder %s20, 1
    %p63 = por %p61, %p62
    %p64 = scmp.ne.s32.totalorder %s56, %s59
    %p65 = scmp.eq.s32.totalorder %s20, 0
    %p66 = por %p64, %p65
    %p67 = scmp.ne.s32.totalorder %s56, %s59
    %p68 = scmp.eq.s32.totalorder %s25, 1
    %p69 = por %p67, %p68
    %p70 = scmp.ne.s32.totalorder %s59, %s60
    %p71 = scmp.eq.s32.totalorder %s25, 0
    %p72 = por %p70, %p71
    %p73 = scmp.ne.s32.totalorder %s59, %s60
    %p74 = scmp.eq.s32.totalorder %s26, 1
    %p75 = por %p73, %p74
    %p77 = scmp.ne.s32.totalorder %s60, %s76
    %p78 = scmp.eq.s32.totalorder %s26, 0
    %p79 = por %p77, %p78
    %s81 = sadd.s32 %s80, 1
    %p84 = scmp.eq.s32.totalorder %s20, 1
    %p85 = scmp.ne.s32.totalorder %s80, %s82
    %p86 = scmp.eq.s32.totalorder %s20, 0
    %p87 = por %p85, %p86
    %p88 = scmp.ne.s32.totalorder %s80, %s82
    %p89 = scmp.eq.s32.totalorder %s25, 1
    %p90 = por %p88, %p89
    %p91 = scmp.ne.s32.totalorder %s82, %s83
    %p92 = scmp.eq.s32.totalorder %s25, 0
    %p93 = por %p91, %p92
    %p94 = scmp.ne.s32.totalorder %s82, %s83
    %p95 = scmp.eq.s32.totalorder %s26, 1
    %p96 = por %p94, %p95
    %p98 = scmp.ne.s32.totalorder %s83, %s97
    %p99 = scmp.eq.s32.totalorder %s26, 0
    %p100 = por %p98, %p99
    %s102 = sadd.s32 %s101, 1
    %p105 = scmp.eq.s32.totalorder %s20, 1
    %p106 = scmp.ne.s32.totalorder %s101, %s103
    %p107 = scmp.eq.s32.totalorder %s20, 0
    %p108 = por %p106, %p107
    %p109 = scmp.ne.s32.totalorder %s101, %s103
    %p110 = scmp.eq.s32.totalorder %s25, 1
    %p111 = por %p109, %p110
    %p112 = scmp.ne.s32.totalorder %s103, %s104
    %p113 = scmp.eq.s32.totalorder %s25, 0
    %p114 = por %p112, %p113
    %p115 = scmp.ne.s32.totalorder %s103, %s104
    %p116 = scmp.eq.s32.totalorder %s26, 1
    %p117 = por %p115, %p116
    %p119 = scmp.ne.s32.totalorder %s104, %s118
    %p120 = scmp.eq.s32.totalorder %s26, 0
    %p121 = por %p119, %p120
    %s123 = sadd.s32 %s122, 1
    %p126 = scmp.eq.s32.totalorder %s20, 1
    %p127 = scmp.ne.s32.totalorder %s122, %s124
    %p128 = scmp.eq.s32.totalorder %s20, 0
    %p129 = por %p127, %p128
    %p130 = scmp.ne.s32.totalorder %s122, %s124
    %p131 = scmp.eq.s32.totalorder %s25, 1
    %p132 = por %p130, %p131
    %p133 = scmp.ne.s32.totalorder %s124, %s125
    %p134 = scmp.eq.s32.totalorder %s25, 0
    %p135 = por %p133, %p134
    %p136 = scmp.ne.s32.totalorder %s124, %s125
    %p137 = scmp.eq.s32.totalorder %s26, 1
    %p138 = por %p136, %p137
    %p140 = scmp.ne.s32.totalorder %s125, %s139
    %p141 = scmp.eq.s32.totalorder %s26, 0
    %p142 = por %p140, %p141
    %s144 = sadd.s32 %s143, 1
    %p147 = scmp.eq.s32.totalorder %s20, 1
    %p148 = scmp.ne.s32.totalorder %s143, %s145
    %p149 = scmp.eq.s32.totalorder %s20, 0
    %p150 = por %p148, %p149
    %p151 = scmp.ne.s32.totalorder %s143, %s145
    %p152 = scmp.eq.s32.totalorder %s25, 1
    %p153 = por %p151, %p152
    %p154 = scmp.ne.s32.totalorder %s145, %s146
    %p155 = scmp.eq.s32.totalorder %s25, 0
    %p156 = por %p154, %p155
    %p157 = scmp.ne.s32.totalorder %s145, %s146
    %p158 = scmp.eq.s32.totalorder %s26, 1
    %p159 = por %p157, %p158
    %p161 = scmp.ne.s32.totalorder %s146, %s160
    %p162 = scmp.eq.s32.totalorder %s26, 0
    %p163 = por %p161, %p162
    %s165 = sadd.s32 %s164, 1
    %p168 = scmp.eq.s32.totalorder %s20, 1
    %p169 = scmp.ne.s32.totalorder %s164, %s166
    %p170 = scmp.eq.s32.totalorder %s20, 0
    %p171 = por %p169, %p170
    %p172 = scmp.ne.s32.totalorder %s164, %s166
    %p173 = scmp.eq.s32.totalorder %s25, 1
    %p174 = por %p172, %p173
    %p175 = scmp.ne.s32.totalorder %s166, %s167
    %p176 = scmp.eq.s32.totalorder %s25, 0
    %p177 = por %p175, %p176
    %p178 = scmp.ne.s32.totalorder %s166, %s167
    %p179 = scmp.eq.s32.totalorder %s26, 1
    %p180 = por %p178, %p179
    %p182 = scmp.ne.s32.totalorder %s167, %s181
    %p183 = scmp.eq.s32.totalorder %s26, 0
    %p184 = por %p182, %p183
    %s186 = sadd.s32 %s185, 1
    %p189 = scmp.eq.s32.totalorder %s20, 1
    %p190 = scmp.ne.s32.totalorder %s185, %s187
    %p191 = scmp.eq.s32.totalorder %s20, 0
    %p192 = por %p190, %p191
    %p193 = scmp.ne.s32.totalorder %s185, %s187
    %p194 = scmp.eq.s32.totalorder %s25, 1
    %p195 = por %p193, %p194
    %p196 = scmp.ne.s32.totalorder %s187, %s188
    %p197 = scmp.eq.s32.totalorder %s25, 0
    %p198 = por %p196, %p197
    %p199 = scmp.ne.s32.totalorder %s187, %s188
    %p200 = scmp.eq.s32.totalorder %s26, 1
    %p201 = por %p199, %p200
    %p203 = scmp.ne.s32.totalorder %s188, %s202
    %p204 = scmp.eq.s32.totalorder %s26, 0
    %p205 = por %p203, %p204
    %s207 = sadd.s32 %s206, 1
    %p210 = scmp.eq.s32.totalorder %s20, 1
    %p211 = scmp.ne.s32.totalorder %s206, %s208
    %p212 = scmp.eq.s32.totalorder %s20, 0
    %p213 = por %p211, %p212
    %p214 = scmp.ne.s32.totalorder %s206, %s208
    %p215 = scmp.eq.s32.totalorder %s25, 1
    %p216 = por %p214, %p215
    %p217 = scmp.ne.s32.totalorder %s208, %s209
    %p218 = scmp.eq.s32.totalorder %s25, 0
    %p219 = por %p217, %p218
    %p220 = scmp.ne.s32.totalorder %s208, %s209
    %p221 = scmp.eq.s32.totalorder %s26, 1
    %p222 = por %p220, %p221
    %p224 = scmp.ne.s32.totalorder %s209, %s223
    %p225 = scmp.eq.s32.totalorder %s26, 0
    %p226 = por %p224, %p225
    %s228 = sadd.s32 %s227, 1
    %p231 = scmp.eq.s32.totalorder %s20, 1
    %p232 = scmp.ne.s32.totalorder %s227, %s229
    %p233 = scmp.eq.s32.totalorder %s20, 0
    %p234 = por %p232, %p233
    %p235 = scmp.ne.s32.totalorder %s227, %s229
    %p236 = scmp.eq.s32.totalorder %s25, 1
    %p237 = por %p235, %p236
    %p238 = scmp.ne.s32.totalorder %s229, %s230
    %p239 = scmp.eq.s32.totalorder %s25, 0
    %p240 = por %p238, %p239
    %p241 = scmp.ne.s32.totalorder %s229, %s230
    %p242 = scmp.eq.s32.totalorder %s26, 1
    %p243 = por %p241, %p242
    %p245 = scmp.ne.s32.totalorder %s230, %s244
    %p246 = scmp.eq.s32.totalorder %s26, 0
    %p247 = por %p245, %p246
    %s249 = sadd.s32 %s248, 1
    %p252 = scmp.eq.s32.totalorder %s20, 1
    %p253 = scmp.ne.s32.totalorder %s248, %s250
    %p254 = scmp.eq.s32.totalorder %s20, 0
    %p255 = por %p253, %p254
    %p256 = scmp.ne.s32.totalorder %s248, %s250
    %p257 = scmp.eq.s32.totalorder %s25, 1
    %p258 = por %p256, %p257
    %p259 = scmp.ne.s32.totalorder %s250, %s251
    %p260 = scmp.eq.s32.totalorder %s25, 0
    %p261 = por %p259, %p260
    %p262 = scmp.ne.s32.totalorder %s250, %s251
    %p263 = scmp.eq.s32.totalorder %s26, 1
    %p264 = por %p262, %p263
    %p266 = scmp.ne.s32.totalorder %s251, %s265
    %p267 = scmp.eq.s32.totalorder %s26, 0
    %p268 = por %p266, %p267
    %s270 = sadd.s32 %s269, 1
    %p273 = scmp.eq.s32.totalorder %s20, 1
    %p274 = scmp.ne.s32.totalorder %s269, %s271
    %p275 = scmp.eq.s32.totalorder %s20, 0
    %p276 = por %p274, %p275
    %p277 = scmp.ne.s32.totalorder %s269, %s271
    %p278 = scmp.eq.s32.totalorder %s25, 1
    %p279 = por %p277, %p278
    %p280 = scmp.ne.s32.totalorder %s271, %s272
    %p281 = scmp.eq.s32.totalorder %s25, 0
    %p282 = por %p280, %p281
    %p283 = scmp.ne.s32.totalorder %s271, %s272
    %p284 = scmp.eq.s32.totalorder %s26, 1
    %p285 = por %p283, %p284
    %p287 = scmp.ne.s32.totalorder %s272, %s286
    %p288 = scmp.eq.s32.totalorder %s26, 0
    %p289 = por %p287, %p288
    %s291 = sadd.s32 %s290, 1
    %p294 = scmp.eq.s32.totalorder %s20, 1
    %p295 = scmp.ne.s32.totalorder %s290, %s292
    %p296 = scmp.eq.s32.totalorder %s20, 0
    %p297 = por %p295, %p296
    %p298 = scmp.ne.s32.totalorder %s290, %s292
    %p299 = scmp.eq.s32.totalorder %s25, 1
    %p300 = por %p298, %p299
    %p301 = scmp.ne.s32.totalorder %s292, %s293
    %p302 = scmp.eq.s32.totalorder %s25, 0
    %p303 = por %p301, %p302
    %p304 = scmp.ne.s32.totalorder %s292, %s293
    %p305 = scmp.eq.s32.totalorder %s26, 1
    %p306 = por %p304, %p305
    %p308 = scmp.ne.s32.totalorder %s293, %s307
    %p309 = scmp.eq.s32.totalorder %s26, 0
    %p310 = por %p308, %p309
    %s312 = sadd.s32 %s311, 1
    %p315 = scmp.eq.s32.totalorder %s20, 1
    %p316 = scmp.ne.s32.totalorder %s311, %s313
    %p317 = scmp.eq.s32.totalorder %s20, 0
    %p318 = por %p316, %p317
    %p319 = scmp.ne.s32.totalorder %s311, %s313
    %p320 = scmp.eq.s32.totalorder %s25, 1
    %p321 = por %p319, %p320
    %p322 = scmp.ne.s32.totalorder %s313, %s314
    %p323 = scmp.eq.s32.totalorder %s25, 0
    %p324 = por %p322, %p323
    %p325 = scmp.ne.s32.totalorder %s313, %s314
    %p326 = scmp.eq.s32.totalorder %s26, 1
    %p327 = por %p325, %p326
    %p329 = scmp.ne.s32.totalorder %s314, %s328
    %p330 = scmp.eq.s32.totalorder %s26, 0
    %p331 = por %p329, %p330
    %s332 = ssub.s32 %s20, %s27
    %p333 = scmp.eq.s32.totalorder %s332, 0
    %s335 = sadd.s32 %s334, 1
    %s336 = scalar_select %p333, %s334, %s335
    %p339 = pneg %p333
    %p340 = scmp.eq.s32.totalorder %s20, 1
    %p341 = por %p339, %p340
    %p342 = scmp.ne.s32.totalorder %s334, %s337
    %p343 = scmp.eq.s32.totalorder %s20, 0
    %p344 = por %p342, %p343
    %p345 = scmp.ne.s32.totalorder %s334, %s337
    %p346 = scmp.eq.s32.totalorder %s25, 1
    %p347 = por %p345, %p346
    %p348 = scmp.ne.s32.totalorder %s337, %s338
    %p349 = scmp.eq.s32.totalorder %s25, 0
    %p350 = por %p348, %p349
    %p351 = scmp.ne.s32.totalorder %s337, %s338
    %p352 = scmp.eq.s32.totalorder %s26, 1
    %p353 = por %p351, %p352
    %p355 = scmp.ne.s32.totalorder %s338, %s354
    %p356 = scmp.eq.s32.totalorder %s26, 0
    %p357 = por %p355, %p356
    %p358 = scmp.le.s32.totalorder 1, %s20
    %p359 = scmp.lt.s32.totalorder %s20, 3
    %p360 = pnand %p358, %p359
    %p361 = pneg %p360
    // Predicated region
    $region9: #{forward.5} parent=5 // pred_check
      _
    $region10: #{forward.5} parent=5 // pred_check_branch
      %363 = sbr.rel (%p360) target = $region12
    $region11: #{forward.5} parent=5 // pred_region
      %s364 = ssub.s32 %s20, 1
      // Predicated region
      $region13: #{forward.5} parent=11 // pred_check
        %p365 = pneg %p93
      $region14: #{forward.5} parent=11 // pred_check_branch
        %367 = sbr.rel (%p365) target = $region16
      $region15: #{forward.5} parent=11 // pred_region
        _
      $region16: #{forward.5} parent=11 // pred_fallthru
        _
      // Predicated region
      $region17: #{forward.5} parent=11 // pred_check
        %p368 = pneg %p114
      $region18: #{forward.5} parent=11 // pred_check_branch
        %370 = sbr.rel (%p368) target = $region20
      $region19: #{forward.5} parent=11 // pred_region
        _
      $region20: #{forward.5} parent=11 // pred_fallthru
        _
      // Predicated region
      $region21: #{forward.5} parent=11 // pred_check
        %p371 = pneg %p135
      $region22: #{forward.5} parent=11 // pred_check_branch
        %373 = sbr.rel (%p371) target = $region24
      $region23: #{forward.5} parent=11 // pred_region
        _
      $region24: #{forward.5} parent=11 // pred_fallthru
        _
      // Predicated region
      $region25: #{forward.5} parent=11 // pred_check
        %p374 = pneg %p156
      $region26: #{forward.5} parent=11 // pred_check_branch
        %376 = sbr.rel (%p374) target = $region28
      $region27: #{forward.5} parent=11 // pred_region
        _
      $region28: #{forward.5} parent=11 // pred_fallthru
        _
      // Predicated region
      $region29: #{forward.5} parent=11 // pred_check
        %p377 = pneg %p177
      $region30: #{forward.5} parent=11 // pred_check_branch
        %379 = sbr.rel (%p377) target = $region32
      $region31: #{forward.5} parent=11 // pred_region
        _
      $region32: #{forward.5} parent=11 // pred_fallthru
        _
      // Predicated region
      $region33: #{forward.5} parent=11 // pred_check
        %p380 = pneg %p198
      $region34: #{forward.5} parent=11 // pred_check_branch
        %382 = sbr.rel (%p380) target = $region36
      $region35: #{forward.5} parent=11 // pred_region
        _
      $region36: #{forward.5} parent=11 // pred_fallthru
        _
      // Predicated region
      $region37: #{forward.5} parent=11 // pred_check
        %p383 = pneg %p219
      $region38: #{forward.5} parent=11 // pred_check_branch
        %385 = sbr.rel (%p383) target = $region40
      $region39: #{forward.5} parent=11 // pred_region
        _
      $region40: #{forward.5} parent=11 // pred_fallthru
        _
      // Predicated region
      $region41: #{forward.5} parent=11 // pred_check
        %p386 = pneg %p240
      $region42: #{forward.5} parent=11 // pred_check_branch
        %388 = sbr.rel (%p386) target = $region44
      $region43: #{forward.5} parent=11 // pred_region
        _
      $region44: #{forward.5} parent=11 // pred_fallthru
        _
      // Predicated region
      $region45: #{forward.5} parent=11 // pred_check
        %p389 = pneg %p261
      $region46: #{forward.5} parent=11 // pred_check_branch
        %391 = sbr.rel (%p389) target = $region48
      $region47: #{forward.5} parent=11 // pred_region
        _
      $region48: #{forward.5} parent=11 // pred_fallthru
        _
      // Predicated region
      $region49: #{forward.5} parent=11 // pred_check
        %p392 = pneg %p282
      $region50: #{forward.5} parent=11 // pred_check_branch
        %394 = sbr.rel (%p392) target = $region52
      $region51: #{forward.5} parent=11 // pred_region
        _
      $region52: #{forward.5} parent=11 // pred_fallthru
        _
      // Predicated region
      $region53: #{forward.5} parent=11 // pred_check
        %p395 = pneg %p303
      $region54: #{forward.5} parent=11 // pred_check_branch
        %397 = sbr.rel (%p395) target = $region56
      $region55: #{forward.5} parent=11 // pred_region
        _
      $region56: #{forward.5} parent=11 // pred_fallthru
        _
      // Predicated region
      $region57: #{forward.5} parent=11 // pred_check
        %p398 = pneg %p324
      $region58: #{forward.5} parent=11 // pred_check_branch
        %400 = sbr.rel (%p398) target = $region60
      $region59: #{forward.5} parent=11 // pred_region
        _
      $region60: #{forward.5} parent=11 // pred_fallthru
        _
    $region12: #{forward.5} parent=5 // pred_fallthru
      _
    %p401 = scmp.lt.s32.totalorder %s20, 2
    // Predicated region
    $region61: #{forward.5} parent=5 // pred_check
      %p402 = pneg %p401
    $region62: #{forward.5} parent=5 // pred_check_branch
      %404 = sbr.rel (%p402) target = $region64
    $region63: #{forward.5} parent=5 // pred_region
      // Predicated region
      $region65: #{forward.5} parent=63 // pred_check
        %p405 = pneg %p40
      $region66: #{forward.5} parent=63 // pred_check_branch
        %407 = sbr.rel (%p405) target = $region68
      $region67: #{forward.5} parent=63 // pred_region
        %p408 = scmp.lt.s32.totalorder %s20, 1
        %s409 = scalar_select %p408, %s20, 1
        %s410 = smul.addr %s409, 8
        %s411 = scalar_lea.vmem %s0, %s410
      $region68: #{forward.5} parent=63 // pred_fallthru
        _
      // Predicated region
      $region69: #{forward.5} parent=63 // pred_check
        %p412 = pneg %p66
      $region70: #{forward.5} parent=63 // pred_check_branch
        %414 = sbr.rel (%p412) target = $region72
      $region71: #{forward.5} parent=63 // pred_region
        %p415 = scmp.lt.s32.totalorder %s20, 1
        %s416 = scalar_select %p415, %s20, 1
        %s417 = scalar_lea.vmem %s1, %s416
      $region72: #{forward.5} parent=63 // pred_fallthru
        _
    $region64: #{forward.5} parent=5 // pred_fallthru
      _
    %p418 = scmp.le.s32.totalorder 1, %s20
    %p419 = scmp.lt.s32.totalorder %s20, 3
    %p420 = pnand %p418, %p419
    %p421 = pneg %p420
    // Predicated region
    $region73: #{forward.5} parent=5 // pred_check
      _
    $region74: #{forward.5} parent=5 // pred_check_branch
      %423 = sbr.rel (%p420) target = $region76
    $region75: #{forward.5} parent=5 // pred_region
      %s424 = ssub.s32 %s20, 1
      %p425 = scmp.lt.s32.totalorder %s25, 1
      %s426 = scalar_select %p425, %s25, 1
      %s427 = smul.addr %s426, 8
      %s428 = scalar_lea.vmem %s0, %s427
      %p429 = pneg %p46
      %p430 = pneg %p43
      %p431 = scmp.lt.s32.totalorder %s25, 1
      %s432 = scalar_select %p431, %s25, 1
      %s433 = scalar_lea.vmem %s1, %s432
      %p434 = pneg %p72
      %p435 = pneg %p69
      %p436 = pneg %p93
      %p437 = pneg %p90
      %p438 = pneg %p114
      %p439 = pneg %p111
      %p440 = pneg %p135
      %p441 = pneg %p132
      %p442 = pneg %p156
      %p443 = pneg %p153
      %p444 = pneg %p177
      %p445 = pneg %p174
      %p446 = pneg %p198
      %p447 = pneg %p195
      %p448 = pneg %p219
      %p449 = pneg %p216
      %p450 = pneg %p240
      %p451 = pneg %p237
      %p452 = pneg %p261
      %p453 = pneg %p258
      %p454 = pneg %p282
      %p455 = pneg %p279
      %p456 = pneg %p303
      %p457 = pneg %p300
      %p458 = pneg %p324
      %p459 = pneg %p321
      %p460 = pneg %p350
      %p461 = pneg %p347
      %p462 = scmp.lt.s32.totalorder %s25, 1
      %s463 = scalar_select %p462, %s25, 1
      %s464 = smul.addr %s463, 8
      %s465 = scalar_lea.vmem %s14, %s464
      %p466 = scmp.lt.s32.totalorder %s25, 1
      %s467 = scalar_select %p466, %s25, 1
      %s468 = smul.addr %s467, 8
      %s469 = scalar_lea.vmem %s0, %s468
      %p470 = scmp.lt.s32.totalorder %s25, 1
      %s471 = scalar_select %p470, %s25, 1
      %s472 = scalar_lea.vmem %s1, %s471
      %p473 = scmp.lt.s32.totalorder %s25, 1
      %s474 = scalar_select %p473, %s25, 1
      %s475 = smul.addr %s474, 8
      %s476 = scalar_lea.vmem %s14, %s475
      %v477 = vld [vmem:[%s469] sm:$0xff]
      %v478 = vld [vmem:[%s472] sm:$0x1]
      %v479 = vld [vmem:[%s2] sm:$0xff]
      %v480 = vld [vmem:[%s2 + $0x8] sm:$0xff]
      %v481 = vld [vmem:[%s2 + $0x10] sm:$0xff]
      %v482 = vld [vmem:[%s2 + $0x18] sm:$0xff]
      %v483 = vld [vmem:[%s3] sm:$0x1]
      %v485 = vlaneseq
      %v486 = vshrl.u32 %v485, 7
      %v487 = vsub.s32 0, %v486
      %v488 = vrot.slane %v483, %v487
      %vm490 = vcmask 261120
      %v492 = vsel %vm490, %v477, 0
      %494 = vmatprep.subr.mxu0 0.0
      %495 = vmatpush1.msra.mxu0 %v479
      %496 = vmatprep.subr.mxu0 0.0
      %497 = vmatpush1.msra.mxu0 %v480
      %498 = vmatprep.subr.mxu0 0.0
      %499 = vmatpush1.msra.mxu0 %v481
      %500 = vmatprep.subr.mxu0 0.0
      %501 = vmatpush1.msra.mxu0 %v482
      %502 = vmatprep.subr.mxu0 0.0
      %503 = vmatpush1.msra.mxu0 0.0
      %504 = vmatprep.subr.mxu0 0.0
      %505 = vmatpush1.msra.mxu0 0.0
      %506 = vmatprep.subr.mxu0 0.0
      %507 = vmatpush1.msra.mxu0 0.0
      %508 = vmatprep.subr.mxu0 0.0
      %509 = vmatpush1.msra.mxu0 0.0
      %510 = vmatprep.subr.mxu0 0.0
      %511 = vmatpush1.msra.mxu0 0.0
      %512 = vmatprep.subr.mxu0 0.0
      %513 = vmatpush1.msra.mxu0 0.0
      %514 = vmatprep.subr.mxu0 0.0
      %515 = vmatpush1.msra.mxu0 0.0
      %516 = vmatprep.subr.mxu0 0.0
      %517 = vmatpush1.msra.mxu0 0.0
      %518 = vmatprep.subr.mxu0 0.0
      %519 = vmatpush1.msra.mxu0 0.0
      %520 = vmatprep.subr.mxu0 0.0
      %521 = vmatpush1.msra.mxu0 0.0
      %522 = vmatprep.subr.mxu0 0.0
      %523 = vmatpush1.msra.mxu0 0.0
      %524 = vmatprep.subr.mxu0 0.0
      %525 = vmatpush1.msra.mxu0 0.0
      %526 = vmatprep.subr.mxu0 0.0
      %527 = vmatpush1.msra.mxu0 0.0
      %528 = vmatprep.subr.mxu0 0.0
      %529 = vmatpush1.msra.mxu0 0.0
      %530 = vmatprep.subr.mxu0 0.0
      %531 = vmatpush1.msra.mxu0 0.0
      %532 = vmatprep.subr.mxu0 0.0
      %533 = vmatpush1.msra.mxu0 0.0
      %534 = vmatprep.subr.mxu0 0.0
      %535 = vmatpush1.msra.mxu0 0.0
      %536 = vmatprep.subr.mxu0 0.0
      %537 = vmatpush1.msra.mxu0 0.0
      %538 = vmatprep.subr.mxu0 0.0
      %539 = vmatpush1.msra.mxu0 0.0
      %540 = vmatprep.subr.mxu0 0.0
      %541 = vmatpush1.msra.mxu0 0.0
      %542 = vmatprep.subr.mxu0 0.0
      %543 = vmatpush1.msra.mxu0 0.0
      %544 = vmatprep.subr.mxu0 0.0
      %545 = vmatpush1.msra.mxu0 0.0
      %546 = vmatprep.subr.mxu0 0.0
      %547 = vmatpush1.msra.mxu0 0.0
      %548 = vmatprep.subr.mxu0 0.0
      %549 = vmatpush1.msra.mxu0 0.0
      %550 = vmatprep.subr.mxu0 0.0
      %551 = vmatpush1.msra.mxu0 0.0
      %552 = vmatprep.subr.mxu0 0.0
      %553 = vmatpush1.msra.mxu0 0.0
      %554 = vmatprep.subr.mxu0 0.0
      %555 = vmatpush1.msra.mxu0 0.0
      %556 = vmatprep.subr.mxu0 0.0
      %557 = vmatpush1.msra.mxu0 0.0
      %558 = vmatprep.mubr.f32.mxu0 0.0
      %559 = vmatmul.mubr.f32.gmra.mrb[0].mxu0 %v492
      %v560 = vpop.f32.mrb[0].mxu0
      %v561 = vadd.f32 %v488, %v560
      %v562 = vpop.f32.mrb[0].mxu0
      %563 = vdwg.mxu0
      %565 = vrot.lane.b32.xlu0 %v561, 96
      %v566 = vpop.permute.xlu0 %565
      %vm567 = vcmask 64512
      %v568 = vsel %vm567, %v561, 0
      %v570 = vsel %vm567, %v566, 0
      %572 = vmatprep.subr.mxu0 0.0
      %573 = vmatpush1.xpose.msra.mxu0 %v570
      %574 = vmatprep.subr.mxu0 0.0
      %575 = vmatpush1.xpose.msra.mxu0 0.0
      %576 = vmatprep.subr.mxu0 0.0
      %577 = vmatpush1.xpose.msra.mxu0 0.0
      %578 = vmatprep.subr.mxu0 0.0
      %579 = vmatpush1.xpose.msra.mxu0 0.0
      %580 = vmatprep.subr.mxu0 0.0
      %581 = vmatpush1.xpose.msra.mxu0 0.0
      %582 = vmatprep.subr.mxu0 0.0
      %583 = vmatpush1.xpose.msra.mxu0 0.0
      %584 = vmatprep.subr.mxu0 0.0
      %585 = vmatpush1.xpose.msra.mxu0 0.0
      %586 = vmatprep.subr.mxu0 0.0
      %587 = vmatpush1.xpose.msra.mxu0 0.0
      %588 = vmatprep.subr.mxu0 0.0
      %589 = vmatpush1.xpose.msra.mxu0 0.0
      %590 = vmatprep.subr.mxu0 0.0
      %591 = vmatpush1.xpose.msra.mxu0 0.0
      %592 = vmatprep.subr.mxu0 0.0
      %593 = vmatpush1.xpose.msra.mxu0 0.0
      %594 = vmatprep.subr.mxu0 0.0
      %595 = vmatpush1.xpose.msra.mxu0 0.0
      %596 = vmatprep.subr.mxu0 0.0
      %597 = vmatpush1.xpose.msra.mxu0 0.0
      %598 = vmatprep.subr.mxu0 0.0
      %599 = vmatpush1.xpose.msra.mxu0 0.0
      %600 = vmatprep.subr.mxu0 0.0
      %601 = vmatpush1.xpose.msra.mxu0 0.0
      %602 = vmatprep.subr.mxu0 0.0
      %603 = vmatpush1.xpose.msra.mxu0 0.0
      %604 = vmatprep.subr.mxu0 0.0
      %605 = vmatpush1.xpose.msra.mxu0 0.0
      %606 = vmatprep.subr.mxu0 0.0
      %607 = vmatpush1.xpose.msra.mxu0 0.0
      %608 = vmatprep.subr.mxu0 0.0
      %609 = vmatpush1.xpose.msra.mxu0 0.0
      %610 = vmatprep.subr.mxu0 0.0
      %611 = vmatpush1.xpose.msra.mxu0 0.0
      %612 = vmatprep.subr.mxu0 0.0
      %613 = vmatpush1.xpose.msra.mxu0 0.0
      %614 = vmatprep.subr.mxu0 0.0
      %615 = vmatpush1.xpose.msra.mxu0 0.0
      %616 = vmatprep.subr.mxu0 0.0
      %617 = vmatpush1.xpose.msra.mxu0 0.0
      %618 = vmatprep.subr.mxu0 0.0
      %619 = vmatpush1.xpose.msra.mxu0 0.0
      %620 = vmatprep.subr.mxu0 0.0
      %621 = vmatpush1.xpose.msra.mxu0 0.0
      %622 = vmatprep.subr.mxu0 0.0
      %623 = vmatpush1.xpose.msra.mxu0 0.0
      %624 = vmatprep.subr.mxu0 0.0
      %625 = vmatpush1.xpose.msra.mxu0 0.0
      %626 = vmatprep.subr.mxu0 0.0
      %627 = vmatpush1.xpose.msra.mxu0 0.0
      %628 = vmatprep.subr.mxu0 0.0
      %629 = vmatpush1.xpose.msra.mxu0 0.0
      %630 = vmatprep.subr.mxu0 0.0
      %631 = vmatpush1.xpose.msra.mxu0 0.0
      %632 = vmatprep.subr.mxu0 0.0
      %633 = vmatpush1.xpose.msra.mxu0 0.0
      %634 = vmatprep.subr.mxu0 0.0
      %635 = vmatpush1.xpose.msra.mxu0 0.0
      %636 = vmatprep.mubr.f32.mxu0 0.0
      %637 = vmatmul.mubr.f32.gmra.mrb[0].mxu0 %v568
      %v638 = vpop.f32.mrb[0].mxu0
      %v639 = vadd.f32 0.0, %v638
      %v640 = vpop.f32.mrb[0].mxu0
      %641 = vdwg.mxu0
      %v642 = vmul.f32 %v639, 0.35355338
      %v644 = vlaneseq
      %v645 = vshrl.u32 %v644, 7
      %v646 = vsub.s32 0, %v645
      %v647 = vrot.slane %v478, %v646
      %v649 = vadd.f32 %v642, %v647
      %v650 = vsel %vm567, %v649, -inf
      %651 = vmax.xlane.f32.xlu0 %v650
      %v652 = vpop.xlane.xlu0 %651
      %v653 = vsub.f32 %v649, %v652
      %v654 = vmul.f32 %v653, 1.442695
      %v655 = vpow.pop %v654
      %v656 = vsel %vm567, %v655, 0.0
      %657 = vadd.xlane.f32.xlu0 %v656
      %v658 = vpop.xlane.xlu0 %657
      %v659 = vrcp.pop %v658
      %v660 = vmul.f32 %v655, %v659
      %661 = vrot.lane.b32.xlu0 %v561, 64
      %v662 = vpop.permute.xlu0 %661
      %v665 = vsel %vm567, %v660, 0
      %667 = vmatprep.subr.mxu0 0.0
      %668 = vmatpush1.msra.mxu0 %v662
      %669 = vmatprep.subr.mxu0 0.0
      %670 = vmatpush1.msra.mxu0 0.0
      %671 = vmatprep.subr.mxu0 0.0
      %672 = vmatpush1.msra.mxu0 0.0
      %673 = vmatprep.subr.mxu0 0.0
      %674 = vmatpush1.msra.mxu0 0.0
      %675 = vmatprep.subr.mxu0 0.0
      %676 = vmatpush1.msra.mxu0 0.0
      %677 = vmatprep.subr.mxu0 0.0
      %678 = vmatpush1.msra.mxu0 0.0
      %679 = vmatprep.subr.mxu0 0.0
      %680 = vmatpush1.msra.mxu0 0.0
      %681 = vmatprep.subr.mxu0 0.0
      %682 = vmatpush1.msra.mxu0 0.0
      %683 = vmatprep.subr.mxu0 0.0
      %684 = vmatpush1.msra.mxu0 0.0
      %685 = vmatprep.subr.mxu0 0.0
      %686 = vmatpush1.msra.mxu0 0.0
      %687 = vmatprep.subr.mxu0 0.0
      %688 = vmatpush1.msra.mxu0 0.0
      %689 = vmatprep.subr.mxu0 0.0
      %690 = vmatpush1.msra.mxu0 0.0
      %691 = vmatprep.subr.mxu0 0.0
      %692 = vmatpush1.msra.mxu0 0.0
      %693 = vmatprep.subr.mxu0 0.0
      %694 = vmatpush1.msra.mxu0 0.0
      %695 = vmatprep.subr.mxu0 0.0
      %696 = vmatpush1.msra.mxu0 0.0
      %697 = vmatprep.subr.mxu0 0.0
      %698 = vmatpush1.msra.mxu0 0.0
      %699 = vmatprep.subr.mxu0 0.0
      %700 = vmatpush1.msra.mxu0 0.0
      %701 = vmatprep.subr.mxu0 0.0
      %702 = vmatpush1.msra.mxu0 0.0
      %703 = vmatprep.subr.mxu0 0.0
      %704 = vmatpush1.msra.mxu0 0.0
      %705 = vmatprep.subr.mxu0 0.0
      %706 = vmatpush1.msra.mxu0 0.0
      %707 = vmatprep.subr.mxu0 0.0
      %708 = vmatpush1.msra.mxu0 0.0
      %709 = vmatprep.subr.mxu0 0.0
      %710 = vmatpush1.msra.mxu0 0.0
      %711 = vmatprep.subr.mxu0 0.0
      %712 = vmatpush1.msra.mxu0 0.0
      %713 = vmatprep.subr.mxu0 0.0
      %714 = vmatpush1.msra.mxu0 0.0
      %715 = vmatprep.subr.mxu0 0.0
      %716 = vmatpush1.msra.mxu0 0.0
      %717 = vmatprep.subr.mxu0 0.0
      %718 = vmatpush1.msra.mxu0 0.0
      %719 = vmatprep.subr.mxu0 0.0
      %720 = vmatpush1.msra.mxu0 0.0
      %721 = vmatprep.subr.mxu0 0.0
      %722 = vmatpush1.msra.mxu0 0.0
      %723 = vmatprep.subr.mxu0 0.0
      %724 = vmatpush1.msra.mxu0 0.0
      %725 = vmatprep.subr.mxu0 0.0
      %726 = vmatpush1.msra.mxu0 0.0
      %727 = vmatprep.subr.mxu0 0.0
      %728 = vmatpush1.msra.mxu0 0.0
      %729 = vmatprep.subr.mxu0 0.0
      %730 = vmatpush1.msra.mxu0 0.0
      %731 = vmatprep.mubr.f32.mxu0 0.0
      %732 = vmatmul.mubr.f32.gmra.mrb[0].mxu0 %v665
      %v733 = vpop.f32.mrb[0].mxu0
      %v734 = vadd.f32 0.0, %v733
      %v735 = vpop.f32.mrb[0].mxu0
      %736 = vdwg.mxu0
      %v737 = vld [vmem:[%s4] sm:$0xff]
      %738 = vrot.lane.b32.xlu0 %v561, 120
      %v739 = vpop.permute.xlu0 %738
      %740 = vrot.lane.b32.xlu0 %v561, 88
      %v741 = vpop.permute.xlu0 %740
      %v742 = vsel %vm567, %v739, 0
      %v744 = vsel %vm567, %v741, 0
      %746 = vmatprep.subr.mxu0 0.0
      %747 = vmatpush1.xpose.msra.mxu0 %v744
      %748 = vmatprep.subr.mxu0 0.0
      %749 = vmatpush1.xpose.msra.mxu0 0.0
      %750 = vmatprep.subr.mxu0 0.0
      %751 = vmatpush1.xpose.msra.mxu0 0.0
      %752 = vmatprep.subr.mxu0 0.0
      %753 = vmatpush1.xpose.msra.mxu0 0.0
      %754 = vmatprep.subr.mxu0 0.0
      %755 = vmatpush1.xpose.msra.mxu0 0.0
      %756 = vmatprep.subr.mxu0 0.0
      %757 = vmatpush1.xpose.msra.mxu0 0.0
      %758 = vmatprep.subr.mxu0 0.0
      %759 = vmatpush1.xpose.msra.mxu0 0.0
      %760 = vmatprep.subr.mxu0 0.0
      %761 = vmatpush1.xpose.msra.mxu0 0.0
      %762 = vmatprep.subr.mxu0 0.0
      %763 = vmatpush1.xpose.msra.mxu0 0.0
      %764 = vmatprep.subr.mxu0 0.0
      %765 = vmatpush1.xpose.msra.mxu0 0.0
      %766 = vmatprep.subr.mxu0 0.0
      %767 = vmatpush1.xpose.msra.mxu0 0.0
      %768 = vmatprep.subr.mxu0 0.0
      %769 = vmatpush1.xpose.msra.mxu0 0.0
      %770 = vmatprep.subr.mxu0 0.0
      %771 = vmatpush1.xpose.msra.mxu0 0.0
      %772 = vmatprep.subr.mxu0 0.0
      %773 = vmatpush1.xpose.msra.mxu0 0.0
      %774 = vmatprep.subr.mxu0 0.0
      %775 = vmatpush1.xpose.msra.mxu0 0.0
      %776 = vmatprep.subr.mxu0 0.0
      %777 = vmatpush1.xpose.msra.mxu0 0.0
      %778 = vmatprep.subr.mxu0 0.0
      %779 = vmatpush1.xpose.msra.mxu0 0.0
      %780 = vmatprep.subr.mxu0 0.0
      %781 = vmatpush1.xpose.msra.mxu0 0.0
      %782 = vmatprep.subr.mxu0 0.0
      %783 = vmatpush1.xpose.msra.mxu0 0.0
      %784 = vmatprep.subr.mxu0 0.0
      %785 = vmatpush1.xpose.msra.mxu0 0.0
      %786 = vmatprep.subr.mxu0 0.0
      %787 = vmatpush1.xpose.msra.mxu0 0.0
      %788 = vmatprep.subr.mxu0 0.0
      %789 = vmatpush1.xpose.msra.mxu0 0.0
      %790 = vmatprep.subr.mxu0 0.0
      %791 = vmatpush1.xpose.msra.mxu0 0.0
      %792 = vmatprep.subr.mxu0 0.0
      %793 = vmatpush1.xpose.msra.mxu0 0.0
      %794 = vmatprep.subr.mxu0 0.0
      %795 = vmatpush1.xpose.msra.mxu0 0.0
      %796 = vmatprep.subr.mxu0 0.0
      %797 = vmatpush1.xpose.msra.mxu0 0.0
      %798 = vmatprep.subr.mxu0 0.0
      %799 = vmatpush1.xpose.msra.mxu0 0.0
      %800 = vmatprep.subr.mxu0 0.0
      %801 = vmatpush1.xpose.msra.mxu0 0.0
      %802 = vmatprep.subr.mxu0 0.0
      %803 = vmatpush1.xpose.msra.mxu0 0.0
      %804 = vmatprep.subr.mxu0 0.0
      %805 = vmatpush1.xpose.msra.mxu0 0.0
      %806 = vmatprep.subr.mxu0 0.0
      %807 = vmatpush1.xpose.msra.mxu0 0.0
      %808 = vmatprep.subr.mxu0 0.0
      %809 = vmatpush1.xpose.msra.mxu0 0.0
      %810 = vmatprep.mubr.f32.mxu0 0.0
      %811 = vmatmul.mubr.f32.gmra.mrb[0].mxu0 %v742
      %v812 = vpop.f32.mrb[0].mxu0
      %v813 = vadd.f32 0.0, %v812
      %v814 = vpop.f32.mrb[0].mxu0
      %815 = vdwg.mxu0
      %v816 = vmul.f32 %v813, 0.35355338
      %v817 = vadd.f32 %v816, %v647
      %v818 = vsel %vm567, %v817, -inf
      %819 = vmax.xlane.f32.xlu0 %v818
      %v820 = vpop.xlane.xlu0 %819
      %v821 = vsub.f32 %v817, %v820
      %v822 = vmul.f32 %v821, 1.442695
      %v823 = vpow.pop %v822
      %v824 = vsel %vm567, %v823, 0.0
      %825 = vadd.xlane.f32.xlu0 %v824
      %v826 = vpop.xlane.xlu0 %825
      %v827 = vrcp.pop %v826
      %v828 = vmul.f32 %v823, %v827
      %829 = vrot.lane.b32.xlu0 %v561, 56
      %v830 = vpop.permute.xlu0 %829
      %v833 = vsel %vm567, %v828, 0
      %835 = vmatprep.subr.mxu0 0.0
      %836 = vmatpush1.msra.mxu0 %v830
      %837 = vmatprep.subr.mxu0 0.0
      %838 = vmatpush1.msra.mxu0 0.0
      %839 = vmatprep.subr.mxu0 0.0
      %840 = vmatpush1.msra.mxu0 0.0
      %841 = vmatprep.subr.mxu0 0.0
      %842 = vmatpush1.msra.mxu0 0.0
      %843 = vmatprep.subr.mxu0 0.0
      %844 = vmatpush1.msra.mxu0 0.0
      %845 = vmatprep.subr.mxu0 0.0
      %846 = vmatpush1.msra.mxu0 0.0
      %847 = vmatprep.subr.mxu0 0.0
      %848 = vmatpush1.msra.mxu0 0.0
      %849 = vmatprep.subr.mxu0 0.0
      %850 = vmatpush1.msra.mxu0 0.0
      %851 = vmatprep.subr.mxu0 0.0
      %852 = vmatpush1.msra.mxu0 0.0
      %853 = vmatprep.subr.mxu0 0.0
      %854 = vmatpush1.msra.mxu0 0.0
      %855 = vmatprep.subr.mxu0 0.0
      %856 = vmatpush1.msra.mxu0 0.0
      %857 = vmatprep.subr.mxu0 0.0
      %858 = vmatpush1.msra.mxu0 0.0
      %859 = vmatprep.subr.mxu0 0.0
      %860 = vmatpush1.msra.mxu0 0.0
      %861 = vmatprep.subr.mxu0 0.0
      %862 = vmatpush1.msra.mxu0 0.0
      %863 = vmatprep.subr.mxu0 0.0
      %864 = vmatpush1.msra.mxu0 0.0
      %865 = vmatprep.subr.mxu0 0.0
      %866 = vmatpush1.msra.mxu0 0.0
      %867 = vmatprep.subr.mxu0 0.0
      %868 = vmatpush1.msra.mxu0 0.0
      %869 = vmatprep.subr.mxu0 0.0
      %870 = vmatpush1.msra.mxu0 0.0
      %871 = vmatprep.subr.mxu0 0.0
      %872 = vmatpush1.msra.mxu0 0.0
      %873 = vmatprep.subr.mxu0 0.0
      %874 = vmatpush1.msra.mxu0 0.0
      %875 = vmatprep.subr.mxu0 0.0
      %876 = vmatpush1.msra.mxu0 0.0
      %877 = vmatprep.subr.mxu0 0.0
      %878 = vmatpush1.msra.mxu0 0.0
      %879 = vmatprep.subr.mxu0 0.0
      %880 = vmatpush1.msra.mxu0 0.0
      %881 = vmatprep.subr.mxu0 0.0
      %882 = vmatpush1.msra.mxu0 0.0
      %883 = vmatprep.subr.mxu0 0.0
      %884 = vmatpush1.msra.mxu0 0.0
      %885 = vmatprep.subr.mxu0 0.0
      %886 = vmatpush1.msra.mxu0 0.0
      %887 = vmatprep.subr.mxu0 0.0
      %888 = vmatpush1.msra.mxu0 0.0
      %889 = vmatprep.subr.mxu0 0.0
      %890 = vmatpush1.msra.mxu0 0.0
      %891 = vmatprep.subr.mxu0 0.0
      %892 = vmatpush1.msra.mxu0 0.0
      %893 = vmatprep.subr.mxu0 0.0
      %894 = vmatpush1.msra.mxu0 0.0
      %895 = vmatprep.subr.mxu0 0.0
      %896 = vmatpush1.msra.mxu0 0.0
      %897 = vmatprep.subr.mxu0 0.0
      %898 = vmatpush1.msra.mxu0 0.0
      %899 = vmatprep.mubr.f32.mxu0 0.0
      %900 = vmatmul.mubr.f32.gmra.mrb[0].mxu0 %v833
      %v901 = vpop.f32.mrb[0].mxu0
      %v902 = vadd.f32 0.0, %v901
      %v903 = vpop.f32.mrb[0].mxu0
      %904 = vdwg.mxu0
      %v905 = vld [vmem:[%s4 + $0x8] sm:$0xff]
      %v907 = vsel %vm567, %v902, 0
      %909 = vmatprep.subr.mxu0 0.0
      %910 = vmatpush1.msra.mxu0 %v905
      %911 = vmatprep.subr.mxu0 0.0
      %912 = vmatpush1.msra.mxu0 0.0
      %913 = vmatprep.subr.mxu0 0.0
      %914 = vmatpush1.msra.mxu0 0.0
      %915 = vmatprep.subr.mxu0 0.0
      %916 = vmatpush1.msra.mxu0 0.0
      %917 = vmatprep.subr.mxu0 0.0
      %918 = vmatpush1.msra.mxu0 0.0
      %919 = vmatprep.subr.mxu0 0.0
      %920 = vmatpush1.msra.mxu0 0.0
      %921 = vmatprep.subr.mxu0 0.0
      %922 = vmatpush1.msra.mxu0 0.0
      %923 = vmatprep.subr.mxu0 0.0
      %924 = vmatpush1.msra.mxu0 0.0
      %925 = vmatprep.subr.mxu0 0.0
      %926 = vmatpush1.msra.mxu0 0.0
      %927 = vmatprep.subr.mxu0 0.0
      %928 = vmatpush1.msra.mxu0 0.0
      %929 = vmatprep.subr.mxu0 0.0
      %930 = vmatpush1.msra.mxu0 0.0
      %931 = vmatprep.subr.mxu0 0.0
      %932 = vmatpush1.msra.mxu0 0.0
      %933 = vmatprep.subr.mxu0 0.0
      %934 = vmatpush1.msra.mxu0 0.0
      %935 = vmatprep.subr.mxu0 0.0
      %936 = vmatpush1.msra.mxu0 0.0
      %937 = vmatprep.subr.mxu0 0.0
      %938 = vmatpush1.msra.mxu0 0.0
      %939 = vmatprep.subr.mxu0 0.0
      %940 = vmatpush1.msra.mxu0 0.0
      %941 = vmatprep.subr.mxu0 0.0
      %942 = vmatpush1.msra.mxu0 0.0
      %943 = vmatprep.subr.mxu0 0.0
      %944 = vmatpush1.msra.mxu0 0.0
      %945 = vmatprep.subr.mxu0 0.0
      %946 = vmatpush1.msra.mxu0 0.0
      %947 = vmatprep.subr.mxu0 0.0
      %948 = vmatpush1.msra.mxu0 0.0
      %949 = vmatprep.subr.mxu0 0.0
      %950 = vmatpush1.msra.mxu0 0.0
      %951 = vmatprep.subr.mxu0 0.0
      %952 = vmatpush1.msra.mxu0 0.0
      %953 = vmatprep.subr.mxu0 0.0
      %954 = vmatpush1.msra.mxu0 0.0
      %955 = vmatprep.subr.mxu0 0.0
      %956 = vmatpush1.msra.mxu0 0.0
      %957 = vmatprep.subr.mxu0 0.0
      %958 = vmatpush1.msra.mxu0 0.0
      %959 = vmatprep.subr.mxu0 0.0
      %960 = vmatpush1.msra.mxu0 0.0
      %961 = vmatprep.subr.mxu0 0.0
      %962 = vmatpush1.msra.mxu0 0.0
      %963 = vmatprep.subr.mxu0 0.0
      %964 = vmatpush1.msra.mxu0 0.0
      %965 = vmatprep.subr.mxu0 0.0
      %966 = vmatpush1.msra.mxu0 0.0
      %967 = vmatprep.subr.mxu0 0.0
      %968 = vmatpush1.msra.mxu0 0.0
      %969 = vmatprep.subr.mxu0 0.0
      %970 = vmatpush1.msra.mxu0 0.0
      %971 = vmatprep.subr.mxu0 0.0
      %972 = vmatpush1.msra.mxu0 0.0
      %973 = vmatprep.mubr.f32.mxu0 0.0
      %974 = vmatmul.mubr.f32.gmra.mrb[0].mxu0 %v907
      %v975 = vpop.f32.mrb[0].mxu0
      %v976 = vadd.f32 0.0, %v975
      %v977 = vpop.f32.mrb[0].mxu0
      %978 = vdwg.mxu0
      %v980 = vsel %vm567, %v734, 0
      %982 = vmatprep.subr.mxu0 0.0
      %983 = vmatpush1.msra.mxu0 %v737
      %984 = vmatprep.subr.mxu0 0.0
      %985 = vmatpush1.msra.mxu0 0.0
      %986 = vmatprep.subr.mxu0 0.0
      %987 = vmatpush1.msra.mxu0 0.0
      %988 = vmatprep.subr.mxu0 0.0
      %989 = vmatpush1.msra.mxu0 0.0
      %990 = vmatprep.subr.mxu0 0.0
      %991 = vmatpush1.msra.mxu0 0.0
      %992 = vmatprep.subr.mxu0 0.0
      %993 = vmatpush1.msra.mxu0 0.0
      %994 = vmatprep.subr.mxu0 0.0
      %995 = vmatpush1.msra.mxu0 0.0
      %996 = vmatprep.subr.mxu0 0.0
      %997 = vmatpush1.msra.mxu0 0.0
      %998 = vmatprep.subr.mxu0 0.0
      %999 = vmatpush1.msra.mxu0 0.0
      %1000 = vmatprep.subr.mxu0 0.0
      %1001 = vmatpush1.msra.mxu0 0.0
      %1002 = vmatprep.subr.mxu0 0.0
      %1003 = vmatpush1.msra.mxu0 0.0
      %1004 = vmatprep.subr.mxu0 0.0
      %1005 = vmatpush1.msra.mxu0 0.0
      %1006 = vmatprep.subr.mxu0 0.0
      %1007 = vmatpush1.msra.mxu0 0.0
      %1008 = vmatprep.subr.mxu0 0.0
      %1009 = vmatpush1.msra.mxu0 0.0
      %1010 = vmatprep.subr.mxu0 0.0
      %1011 = vmatpush1.msra.mxu0 0.0
      %1012 = vmatprep.subr.mxu0 0.0
      %1013 = vmatpush1.msra.mxu0 0.0
      %1014 = vmatprep.subr.mxu0 0.0
      %1015 = vmatpush1.msra.mxu0 0.0
      %1016 = vmatprep.subr.mxu0 0.0
      %1017 = vmatpush1.msra.mxu0 0.0
      %1018 = vmatprep.subr.mxu0 0.0
      %1019 = vmatpush1.msra.mxu0 0.0
      %1020 = vmatprep.subr.mxu0 0.0
      %1021 = vmatpush1.msra.mxu0 0.0
      %1022 = vmatprep.subr.mxu0 0.0
      %1023 = vmatpush1.msra.mxu0 0.0
      %1024 = vmatprep.subr.mxu0 0.0
      %1025 = vmatpush1.msra.mxu0 0.0
      %1026 = vmatprep.subr.mxu0 0.0
      %1027 = vmatpush1.msra.mxu0 0.0
      %1028 = vmatprep.subr.mxu0 0.0
      %1029 = vmatpush1.msra.mxu0 0.0
      %1030 = vmatprep.subr.mxu0 0.0
      %1031 = vmatpush1.msra.mxu0 0.0
      %1032 = vmatprep.subr.mxu0 0.0
      %1033 = vmatpush1.msra.mxu0 0.0
      %1034 = vmatprep.subr.mxu0 0.0
      %1035 = vmatpush1.msra.mxu0 0.0
      %1036 = vmatprep.subr.mxu0 0.0
      %1037 = vmatpush1.msra.mxu0 0.0
      %1038 = vmatprep.subr.mxu0 0.0
      %1039 = vmatpush1.msra.mxu0 0.0
      %1040 = vmatprep.subr.mxu0 0.0
      %1041 = vmatpush1.msra.mxu0 0.0
      %1042 = vmatprep.subr.mxu0 0.0
      %1043 = vmatpush1.msra.mxu0 0.0
      %1044 = vmatprep.subr.mxu0 0.0
      %1045 = vmatpush1.msra.mxu0 0.0
      %1046 = vmatprep.mubr.f32.mxu0 0.0
      %1047 = vmatmul.mubr.f32.gmra.mrb[0].mxu0 %v980
      %v1048 = vpop.f32.mrb[0].mxu0
      %v1049 = vadd.f32 %v976, %v1048
      %v1050 = vpop.f32.mrb[0].mxu0
      %1051 = vdwg.mxu0
      %1052 = vrot.lane.b32.xlu0 %v561, 112
      %v1053 = vpop.permute.xlu0 %1052
      %1054 = vrot.lane.b32.xlu0 %v561, 80
      %v1055 = vpop.permute.xlu0 %1054
      %v1056 = vsel %vm567, %v1053, 0
      %v1058 = vsel %vm567, %v1055, 0
      %1060 = vmatprep.subr.mxu0 0.0
      %1061 = vmatpush1.xpose.msra.mxu0 %v1058
      %1062 = vmatprep.subr.mxu0 0.0
      %1063 = vmatpush1.xpose.msra.mxu0 0.0
      %1064 = vmatprep.subr.mxu0 0.0
      %1065 = vmatpush1.xpose.msra.mxu0 0.0
      %1066 = vmatprep.subr.mxu0 0.0
      %1067 = vmatpush1.xpose.msra.mxu0 0.0
      %1068 = vmatprep.subr.mxu0 0.0
      %1069 = vmatpush1.xpose.msra.mxu0 0.0
      %1070 = vmatprep.subr.mxu0 0.0
      %1071 = vmatpush1.xpose.msra.mxu0 0.0
      %1072 = vmatprep.subr.mxu0 0.0
      %1073 = vmatpush1.xpose.msra.mxu0 0.0
      %1074 = vmatprep.subr.mxu0 0.0
      %1075 = vmatpush1.xpose.msra.mxu0 0.0
      %1076 = vmatprep.subr.mxu0 0.0
      %1077 = vmatpush1.xpose.msra.mxu0 0.0
      %1078 = vmatprep.subr.mxu0 0.0
      %1079 = vmatpush1.xpose.msra.mxu0 0.0
      %1080 = vmatprep.subr.mxu0 0.0
      %1081 = vmatpush1.xpose.msra.mxu0 0.0
      %1082 = vmatprep.subr.mxu0 0.0
      %1083 = vmatpush1.xpose.msra.mxu0 0.0
      %1084 = vmatprep.subr.mxu0 0.0
      %1085 = vmatpush1.xpose.msra.mxu0 0.0
      %1086 = vmatprep.subr.mxu0 0.0
      %1087 = vmatpush1.xpose.msra.mxu0 0.0
      %1088 = vmatprep.subr.mxu0 0.0
      %1089 = vmatpush1.xpose.msra.mxu0 0.0
      %1090 = vmatprep.subr.mxu0 0.0
      %1091 = vmatpush1.xpose.msra.mxu0 0.0
      %1092 = vmatprep.subr.mxu0 0.0
      %1093 = vmatpush1.xpose.msra.mxu0 0.0
      %1094 = vmatprep.subr.mxu0 0.0
      %1095 = vmatpush1.xpose.msra.mxu0 0.0
      %1096 = vmatprep.subr.mxu0 0.0
      %1097 = vmatpush1.xpose.msra.mxu0 0.0
      %1098 = vmatprep.subr.mxu0 0.0
      %1099 = vmatpush1.xpose.msra.mxu0 0.0
      %1100 = vmatprep.subr.mxu0 0.0
      %1101 = vmatpush1.xpose.msra.mxu0 0.0
      %1102 = vmatprep.subr.mxu0 0.0
      %1103 = vmatpush1.xpose.msra.mxu0 0.0
      %1104 = vmatprep.subr.mxu0 0.0
      %1105 = vmatpush1.xpose.msra.mxu0 0.0
      %1106 = vmatprep.subr.mxu0 0.0
      %1107 = vmatpush1.xpose.msra.mxu0 0.0
      %1108 = vmatprep.subr.mxu0 0.0
      %1109 = vmatpush1.xpose.msra.mxu0 0.0
      %1110 = vmatprep.subr.mxu0 0.0
      %1111 = vmatpush1.xpose.msra.mxu0 0.0
      %1112 = vmatprep.subr.mxu0 0.0
      %1113 = vmatpush1.xpose.msra.mxu0 0.0
      %1114 = vmatprep.subr.mxu0 0.0
      %1115 = vmatpush1.xpose.msra.mxu0 0.0
      %1116 = vmatprep.subr.mxu0 0.0
      %1117 = vmatpush1.xpose.msra.mxu0 0.0
      %1118 = vmatprep.subr.mxu0 0.0
      %1119 = vmatpush1.xpose.msra.mxu0 0.0
      %1120 = vmatprep.subr.mxu0 0.0
      %1121 = vmatpush1.xpose.msra.mxu0 0.0
      %1122 = vmatprep.subr.mxu0 0.0
      %1123 = vmatpush1.xpose.msra.mxu0 0.0
      %1124 = vmatprep.mubr.f32.mxu0 0.0
      %1125 = vmatmul.mubr.f32.gmra.mrb[0].mxu0 %v1056
      %v1126 = vpop.f32.mrb[0].mxu0
      %v1127 = vadd.f32 0.0, %v1126
      %v1128 = vpop.f32.mrb[0].mxu0
      %1129 = vdwg.mxu0
      %v1130 = vmul.f32 %v1127, 0.35355338
      %v1131 = vadd.f32 %v1130, %v647
      %v1132 = vsel %vm567, %v1131, -inf
      %1133 = vmax.xlane.f32.xlu0 %v1132
      %v1134 = vpop.xlane.xlu0 %1133
      %v1135 = vsub.f32 %v1131, %v1134
      %v1136 = vmul.f32 %v1135, 1.442695
      %v1137 = vpow.pop %v1136
      %v1138 = vsel %vm567, %v1137, 0.0
      %1139 = vadd.xlane.f32.xlu0 %v1138
      %v1140 = vpop.xlane.xlu0 %1139
      %v1141 = vrcp.pop %v1140
      %v1142 = vmul.f32 %v1137, %v1141
      %1143 = vrot.lane.b32.xlu0 %v561, 48
      %v1144 = vpop.permute.xlu0 %1143
      %v1147 = vsel %vm567, %v1142, 0
      %1149 = vmatprep.subr.mxu0 0.0
      %1150 = vmatpush1.msra.mxu0 %v1144
      %1151 = vmatprep.subr.mxu0 0.0
      %1152 = vmatpush1.msra.mxu0 0.0
      %1153 = vmatprep.subr.mxu0 0.0
      %1154 = vmatpush1.msra.mxu0 0.0
      %1155 = vmatprep.subr.mxu0 0.0
      %1156 = vmatpush1.msra.mxu0 0.0
      %1157 = vmatprep.subr.mxu0 0.0
      %1158 = vmatpush1.msra.mxu0 0.0
      %1159 = vmatprep.subr.mxu0 0.0
      %1160 = vmatpush1.msra.mxu0 0.0
      %1161 = vmatprep.subr.mxu0 0.0
      %1162 = vmatpush1.msra.mxu0 0.0
      %1163 = vmatprep.subr.mxu0 0.0
      %1164 = vmatpush1.msra.mxu0 0.0
      %1165 = vmatprep.subr.mxu0 0.0
      %1166 = vmatpush1.msra.mxu0 0.0
      %1167 = vmatprep.subr.mxu0 0.0
      %1168 = vmatpush1.msra.mxu0 0.0
      %1169 = vmatprep.subr.mxu0 0.0
      %1170 = vmatpush1.msra.mxu0 0.0
      %1171 = vmatprep.subr.mxu0 0.0
      %1172 = vmatpush1.msra.mxu0 0.0
      %1173 = vmatprep.subr.mxu0 0.0
      %1174 = vmatpush1.msra.mxu0 0.0
      %1175 = vmatprep.subr.mxu0 0.0
      %1176 = vmatpush1.msra.mxu0 0.0
      %1177 = vmatprep.subr.mxu0 0.0
      %1178 = vmatpush1.msra.mxu0 0.0
      %1179 = vmatprep.subr.mxu0 0.0
      %1180 = vmatpush1.msra.mxu0 0.0
      %1181 = vmatprep.subr.mxu0 0.0
      %1182 = vmatpush1.msra.mxu0 0.0
      %1183 = vmatprep.subr.mxu0 0.0
      %1184 = vmatpush1.msra.mxu0 0.0
      %1185 = vmatprep.subr.mxu0 0.0
      %1186 = vmatpush1.msra.mxu0 0.0
      %1187 = vmatprep.subr.mxu0 0.0
      %1188 = vmatpush1.msra.mxu0 0.0
      %1189 = vmatprep.subr.mxu0 0.0
      %1190 = vmatpush1.msra.mxu0 0.0
      %1191 = vmatprep.subr.mxu0 0.0
      %1192 = vmatpush1.msra.mxu0 0.0
      %1193 = vmatprep.subr.mxu0 0.0
      %1194 = vmatpush1.msra.mxu0 0.0
      %1195 = vmatprep.subr.mxu0 0.0
      %1196 = vmatpush1.msra.mxu0 0.0
      %1197 = vmatprep.subr.mxu0 0.0
      %1198 = vmatpush1.msra.mxu0 0.0
      %1199 = vmatprep.subr.mxu0 0.0
      %1200 = vmatpush1.msra.mxu0 0.0
      %1201 = vmatprep.subr.mxu0 0.0
      %1202 = vmatpush1.msra.mxu0 0.0
      %1203 = vmatprep.subr.mxu0 0.0
      %1204 = vmatpush1.msra.mxu0 0.0
      %1205 = vmatprep.subr.mxu0 0.0
      %1206 = vmatpush1.msra.mxu0 0.0
      %1207 = vmatprep.subr.mxu0 0.0
      %1208 = vmatpush1.msra.mxu0 0.0
      %1209 = vmatprep.subr.mxu0 0.0
      %1210 = vmatpush1.msra.mxu0 0.0
      %1211 = vmatprep.subr.mxu0 0.0
      %1212 = vmatpush1.msra.mxu0 0.0
      %1213 = vmatprep.mubr.f32.mxu0 0.0
      %1214 = vmatmul.mubr.f32.gmra.mrb[0].mxu0 %v1147
      %v1215 = vpop.f32.mrb[0].mxu0
      %v1216 = vadd.f32 0.0, %v1215
      %v1217 = vpop.f32.mrb[0].mxu0
      %1218 = vdwg.mxu0
      %v1219 = vld [vmem:[%s4 + $0x10] sm:$0xff]
      %v1221 = vsel %vm567, %v1216, 0
      %1223 = vmatprep.subr.mxu0 0.0
      %1224 = vmatpush1.msra.mxu0 %v1219
      %1225 = vmatprep.subr.mxu0 0.0
      %1226 = vmatpush1.msra.mxu0 0.0
      %1227 = vmatprep.subr.mxu0 0.0
      %1228 = vmatpush1.msra.mxu0 0.0
      %1229 = vmatprep.subr.mxu0 0.0
      %1230 = vmatpush1.msra.mxu0 0.0
      %1231 = vmatprep.subr.mxu0 0.0
      %1232 = vmatpush1.msra.mxu0 0.0
      %1233 = vmatprep.subr.mxu0 0.0
      %1234 = vmatpush1.msra.mxu0 0.0
      %1235 = vmatprep.subr.mxu0 0.0
      %1236 = vmatpush1.msra.mxu0 0.0
      %1237 = vmatprep.subr.mxu0 0.0
      %1238 = vmatpush1.msra.mxu0 0.0
      %1239 = vmatprep.subr.mxu0 0.0
      %1240 = vmatpush1.msra.mxu0 0.0
      %1241 = vmatprep.subr.mxu0 0.0
      %1242 = vmatpush1.msra.mxu0 0.0
      %1243 = vmatprep.subr.mxu0 0.0
      %1244 = vmatpush1.msra.mxu0 0.0
      %1245 = vmatprep.subr.mxu0 0.0
      %1246 = vmatpush1.msra.mxu0 0.0
      %1247 = vmatprep.subr.mxu0 0.0
      %1248 = vmatpush1.msra.mxu0 0.0
      %1249 = vmatprep.subr.mxu0 0.0
      %1250 = vmatpush1.msra.mxu0 0.0
      %1251 = vmatprep.subr.mxu0 0.0
      %1252 = vmatpush1.msra.mxu0 0.0
      %1253 = vmatprep.subr.mxu0 0.0
      %1254 = vmatpush1.msra.mxu0 0.0
      %1255 = vmatprep.subr.mxu0 0.0
      %1256 = vmatpush1.msra.mxu0 0.0
      %1257 = vmatprep.subr.mxu0 0.0
      %1258 = vmatpush1.msra.mxu0 0.0
      %1259 = vmatprep.subr.mxu0 0.0
      %1260 = vmatpush1.msra.mxu0 0.0
      %1261 = vmatprep.subr.mxu0 0.0
      %1262 = vmatpush1.msra.mxu0 0.0
      %1263 = vmatprep.subr.mxu0 0.0
      %1264 = vmatpush1.msra.mxu0 0.0
      %1265 = vmatprep.subr.mxu0 0.0
      %1266 = vmatpush1.msra.mxu0 0.0
      %1267 = vmatprep.subr.mxu0 0.0
      %1268 = vmatpush1.msra.mxu0 0.0
      %1269 = vmatprep.subr.mxu0 0.0
      %1270 = vmatpush1.msra.mxu0 0.0
      %1271 = vmatprep.subr.mxu0 0.0
      %1272 = vmatpush1.msra.mxu0 0.0
      %1273 = vmatprep.subr.mxu0 0.0
      %1274 = vmatpush1.msra.mxu0 0.0
      %1275 = vmatprep.subr.mxu0 0.0
      %1276 = vmatpush1.msra.mxu0 0.0
      %1277 = vmatprep.subr.mxu0 0.0
      %1278 = vmatpush1.msra.mxu0 0.0
      %1279 = vmatprep.subr.mxu0 0.0
      %1280 = vmatpush1.msra.mxu0 0.0
      %1281 = vmatprep.subr.mxu0 0.0
      %1282 = vmatpush1.msra.mxu0 0.0
      %1283 = vmatprep.subr.mxu0 0.0
      %1284 = vmatpush1.msra.mxu0 0.0
      %1285 = vmatprep.subr.mxu0 0.0
      %1286 = vmatpush1.msra.mxu0 0.0
      %1287 = vmatprep.mubr.f32.mxu0 0.0
      %1288 = vmatmul.mubr.f32.gmra.mrb[0].mxu0 %v1221
      %v1289 = vpop.f32.mrb[0].mxu0
      %v1290 = vadd.f32 0.0, %v1289
      %v1291 = vpop.f32.mrb[0].mxu0
      %1292 = vdwg.mxu0
      %v1293 = vadd.f32 %v1049, %v1290
      %1294 = vrot.lane.b32.xlu0 %v561, 104
      %v1295 = vpop.permute.xlu0 %1294
      %1296 = vrot.lane.b32.xlu0 %v561, 72
      %v1297 = vpop.permute.xlu0 %1296
      %v1298 = vsel %vm567, %v1295, 0
      %v1300 = vsel %vm567, %v1297, 0
      %1302 = vmatprep.subr.mxu0 0.0
      %1303 = vmatpush1.xpose.msra.mxu0 %v1300
      %1304 = vmatprep.subr.mxu0 0.0
      %1305 = vmatpush1.xpose.msra.mxu0 0.0
      %1306 = vmatprep.subr.mxu0 0.0
      %1307 = vmatpush1.xpose.msra.mxu0 0.0
      %1308 = vmatprep.subr.mxu0 0.0
      %1309 = vmatpush1.xpose.msra.mxu0 0.0
      %1310 = vmatprep.subr.mxu0 0.0
      %1311 = vmatpush1.xpose.msra.mxu0 0.0
      %1312 = vmatprep.subr.mxu0 0.0
      %1313 = vmatpush1.xpose.msra.mxu0 0.0
      %1314 = vmatprep.subr.mxu0 0.0
      %1315 = vmatpush1.xpose.msra.mxu0 0.0
      %1316 = vmatprep.subr.mxu0 0.0
      %1317 = vmatpush1.xpose.msra.mxu0 0.0
      %1318 = vmatprep.subr.mxu0 0.0
      %1319 = vmatpush1.xpose.msra.mxu0 0.0
      %1320 = vmatprep.subr.mxu0 0.0
      %1321 = vmatpush1.xpose.msra.mxu0 0.0
      %1322 = vmatprep.subr.mxu0 0.0
      %1323 = vmatpush1.xpose.msra.mxu0 0.0
      %1324 = vmatprep.subr.mxu0 0.0
      %1325 = vmatpush1.xpose.msra.mxu0 0.0
      %1326 = vmatprep.subr.mxu0 0.0
      %1327 = vmatpush1.xpose.msra.mxu0 0.0
      %1328 = vmatprep.subr.mxu0 0.0
      %1329 = vmatpush1.xpose.msra.mxu0 0.0
      %1330 = vmatprep.subr.mxu0 0.0
      %1331 = vmatpush1.xpose.msra.mxu0 0.0
      %1332 = vmatprep.subr.mxu0 0.0
      %1333 = vmatpush1.xpose.msra.mxu0 0.0
      %1334 = vmatprep.subr.mxu0 0.0
      %1335 = vmatpush1.xpose.msra.mxu0 0.0
      %1336 = vmatprep.subr.mxu0 0.0
      %1337 = vmatpush1.xpose.msra.mxu0 0.0
      %1338 = vmatprep.subr.mxu0 0.0
      %1339 = vmatpush1.xpose.msra.mxu0 0.0
      %1340 = vmatprep.subr.mxu0 0.0
      %1341 = vmatpush1.xpose.msra.mxu0 0.0
      %1342 = vmatprep.subr.mxu0 0.0
      %1343 = vmatpush1.xpose.msra.mxu0 0.0
      %1344 = vmatprep.subr.mxu0 0.0
      %1345 = vmatpush1.xpose.msra.mxu0 0.0
      %1346 = vmatprep.subr.mxu0 0.0
      %1347 = vmatpush1.xpose.msra.mxu0 0.0
      %1348 = vmatprep.subr.mxu0 0.0
      %1349 = vmatpush1.xpose.msra.mxu0 0.0
      %1350 = vmatprep.subr.mxu0 0.0
      %1351 = vmatpush1.xpose.msra.mxu0 0.0
      %1352 = vmatprep.subr.mxu0 0.0
      %1353 = vmatpush1.xpose.msra.mxu0 0.0
      %1354 = vmatprep.subr.mxu0 0.0
      %1355 = vmatpush1.xpose.msra.mxu0 0.0
      %1356 = vmatprep.subr.mxu0 0.0
      %1357 = vmatpush1.xpose.msra.mxu0 0.0
      %1358 = vmatprep.subr.mxu0 0.0
      %1359 = vmatpush1.xpose.msra.mxu0 0.0
      %1360 = vmatprep.subr.mxu0 0.0
      %1361 = vmatpush1.xpose.msra.mxu0 0.0
      %1362 = vmatprep.subr.mxu0 0.0
      %1363 = vmatpush1.xpose.msra.mxu0 0.0
      %1364 = vmatprep.subr.mxu0 0.0
      %1365 = vmatpush1.xpose.msra.mxu0 0.0
      %1366 = vmatprep.mubr.f32.mxu0 0.0
      %1367 = vmatmul.mubr.f32.gmra.mrb[0].mxu0 %v1298
      %v1368 = vpop.f32.mrb[0].mxu0
      %v1369 = vadd.f32 0.0, %v1368
      %v1370 = vpop.f32.mrb[0].mxu0
      %1371 = vdwg.mxu0
      %v1372 = vmul.f32 %v1369, 0.35355338
      %v1373 = vadd.f32 %v1372, %v647
      %v1374 = vsel %vm567, %v1373, -inf
      %1375 = vmax.xlane.f32.xlu0 %v1374
      %v1376 = vpop.xlane.xlu0 %1375
      %v1377 = vsub.f32 %v1373, %v1376
      %v1378 = vmul.f32 %v1377, 1.442695
      %v1379 = vpow.pop %v1378
      %v1380 = vsel %vm567, %v1379, 0.0
      %1381 = vadd.xlane.f32.xlu0 %v1380
      %v1382 = vpop.xlane.xlu0 %1381
      %v1383 = vrcp.pop %v1382
      %v1384 = vmul.f32 %v1379, %v1383
      %1385 = vrot.lane.b32.xlu0 %v561, 40
      %v1386 = vpop.permute.xlu0 %1385
      %v1389 = vsel %vm567, %v1384, 0
      %1391 = vmatprep.subr.mxu0 0.0
      %1392 = vmatpush1.msra.mxu0 %v1386
      %1393 = vmatprep.subr.mxu0 0.0
      %1394 = vmatpush1.msra.mxu0 0.0
      %1395 = vmatprep.subr.mxu0 0.0
      %1396 = vmatpush1.msra.mxu0 0.0
      %1397 = vmatprep.subr.mxu0 0.0
      %1398 = vmatpush1.msra.mxu0 0.0
      %1399 = vmatprep.subr.mxu0 0.0
      %1400 = vmatpush1.msra.mxu0 0.0
      %1401 = vmatprep.subr.mxu0 0.0
      %1402 = vmatpush1.msra.mxu0 0.0
      %1403 = vmatprep.subr.mxu0 0.0
      %1404 = vmatpush1.msra.mxu0 0.0
      %1405 = vmatprep.subr.mxu0 0.0
      %1406 = vmatpush1.msra.mxu0 0.0
      %1407 = vmatprep.subr.mxu0 0.0
      %1408 = vmatpush1.msra.mxu0 0.0
      %1409 = vmatprep.subr.mxu0 0.0
      %1410 = vmatpush1.msra.mxu0 0.0
      %1411 = vmatprep.subr.mxu0 0.0
      %1412 = vmatpush1.msra.mxu0 0.0
      %1413 = vmatprep.subr.mxu0 0.0
      %1414 = vmatpush1.msra.mxu0 0.0
      %1415 = vmatprep.subr.mxu0 0.0
      %1416 = vmatpush1.msra.mxu0 0.0
      %1417 = vmatprep.subr.mxu0 0.0
      %1418 = vmatpush1.msra.mxu0 0.0
      %1419 = vmatprep.subr.mxu0 0.0
      %1420 = vmatpush1.msra.mxu0 0.0
      %1421 = vmatprep.subr.mxu0 0.0
      %1422 = vmatpush1.msra.mxu0 0.0
      %1423 = vmatprep.subr.mxu0 0.0
      %1424 = vmatpush1.msra.mxu0 0.0
      %1425 = vmatprep.subr.mxu0 0.0
      %1426 = vmatpush1.msra.mxu0 0.0
      %1427 = vmatprep.subr.mxu0 0.0
      %1428 = vmatpush1.msra.mxu0 0.0
      %1429 = vmatprep.subr.mxu0 0.0
      %1430 = vmatpush1.msra.mxu0 0.0
      %1431 = vmatprep.subr.mxu0 0.0
      %1432 = vmatpush1.msra.mxu0 0.0
      %1433 = vmatprep.subr.mxu0 0.0
      %1434 = vmatpush1.msra.mxu0 0.0
      %1435 = vmatprep.subr.mxu0 0.0
      %1436 = vmatpush1.msra.mxu0 0.0
      %1437 = vmatprep.subr.mxu0 0.0
      %1438 = vmatpush1.msra.mxu0 0.0
      %1439 = vmatprep.subr.mxu0 0.0
      %1440 = vmatpush1.msra.mxu0 0.0
      %1441 = vmatprep.subr.mxu0 0.0
      %1442 = vmatpush1.msra.mxu0 0.0
      %1443 = vmatprep.subr.mxu0 0.0
      %1444 = vmatpush1.msra.mxu0 0.0
      %1445 = vmatprep.subr.mxu0 0.0
      %1446 = vmatpush1.msra.mxu0 0.0
      %1447 = vmatprep.subr.mxu0 0.0
      %1448 = vmatpush1.msra.mxu0 0.0
      %1449 = vmatprep.subr.mxu0 0.0
      %1450 = vmatpush1.msra.mxu0 0.0
      %1451 = vmatprep.subr.mxu0 0.0
      %1452 = vmatpush1.msra.mxu0 0.0
      %1453 = vmatprep.subr.mxu0 0.0
      %1454 = vmatpush1.msra.mxu0 0.0
      %1455 = vmatprep.mubr.f32.mxu0 0.0
      %1456 = vmatmul.mubr.f32.gmra.mrb[0].mxu0 %v1389
      %v1457 = vpop.f32.mrb[0].mxu0
      %v1458 = vadd.f32 0.0, %v1457
      %v1459 = vpop.f32.mrb[0].mxu0
      %1460 = vdwg.mxu0
      %v1461 = vld [vmem:[%s4 + $0x18] sm:$0xff]
      %v1463 = vsel %vm567, %v1458, 0
      %1465 = vmatprep.subr.mxu0 0.0
      %1466 = vmatpush1.msra.mxu0 %v1461
      %1467 = vmatprep.subr.mxu0 0.0
      %1468 = vmatpush1.msra.mxu0 0.0
      %1469 = vmatprep.subr.mxu0 0.0
      %1470 = vmatpush1.msra.mxu0 0.0
      %1471 = vmatprep.subr.mxu0 0.0
      %1472 = vmatpush1.msra.mxu0 0.0
      %1473 = vmatprep.subr.mxu0 0.0
      %1474 = vmatpush1.msra.mxu0 0.0
      %1475 = vmatprep.subr.mxu0 0.0
      %1476 = vmatpush1.msra.mxu0 0.0
      %1477 = vmatprep.subr.mxu0 0.0
      %1478 = vmatpush1.msra.mxu0 0.0
      %1479 = vmatprep.subr.mxu0 0.0
      %1480 = vmatpush1.msra.mxu0 0.0
      %1481 = vmatprep.subr.mxu0 0.0
      %1482 = vmatpush1.msra.mxu0 0.0
      %1483 = vmatprep.subr.mxu0 0.0
      %1484 = vmatpush1.msra.mxu0 0.0
      %1485 = vmatprep.subr.mxu0 0.0
      %1486 = vmatpush1.msra.mxu0 0.0
      %1487 = vmatprep.subr.mxu0 0.0
      %1488 = vmatpush1.msra.mxu0 0.0
      %1489 = vmatprep.subr.mxu0 0.0
      %1490 = vmatpush1.msra.mxu0 0.0
      %1491 = vmatprep.subr.mxu0 0.0
      %1492 = vmatpush1.msra.mxu0 0.0
      %1493 = vmatprep.subr.mxu0 0.0
      %1494 = vmatpush1.msra.mxu0 0.0
      %1495 = vmatprep.subr.mxu0 0.0
      %1496 = vmatpush1.msra.mxu0 0.0
      %1497 = vmatprep.subr.mxu0 0.0
      %1498 = vmatpush1.msra.mxu0 0.0
      %1499 = vmatprep.subr.mxu0 0.0
      %1500 = vmatpush1.msra.mxu0 0.0
      %1501 = vmatprep.subr.mxu0 0.0
      %1502 = vmatpush1.msra.mxu0 0.0
      %1503 = vmatprep.subr.mxu0 0.0
      %1504 = vmatpush1.msra.mxu0 0.0
      %1505 = vmatprep.subr.mxu0 0.0
      %1506 = vmatpush1.msra.mxu0 0.0
      %1507 = vmatprep.subr.mxu0 0.0
      %1508 = vmatpush1.msra.mxu0 0.0
      %1509 = vmatprep.subr.mxu0 0.0
      %1510 = vmatpush1.msra.mxu0 0.0
      %1511 = vmatprep.subr.mxu0 0.0
      %1512 = vmatpush1.msra.mxu0 0.0
      %1513 = vmatprep.subr.mxu0 0.0
      %1514 = vmatpush1.msra.mxu0 0.0
      %1515 = vmatprep.subr.mxu0 0.0
      %1516 = vmatpush1.msra.mxu0 0.0
      %1517 = vmatprep.subr.mxu0 0.0
      %1518 = vmatpush1.msra.mxu0 0.0
      %1519 = vmatprep.subr.mxu0 0.0
      %1520 = vmatpush1.msra.mxu0 0.0
      %1521 = vmatprep.subr.mxu0 0.0
      %1522 = vmatpush1.msra.mxu0 0.0
      %1523 = vmatprep.subr.mxu0 0.0
      %1524 = vmatpush1.msra.mxu0 0.0
      %1525 = vmatprep.subr.mxu0 0.0
      %1526 = vmatpush1.msra.mxu0 0.0
      %1527 = vmatprep.subr.mxu0 0.0
      %1528 = vmatpush1.msra.mxu0 0.0
      %1529 = vmatprep.mubr.f32.mxu0 0.0
      %1530 = vmatmul.mubr.f32.gmra.mrb[0].mxu0 %v1463
      %v1531 = vpop.f32.mrb[0].mxu0
      %v1532 = vadd.f32 0.0, %v1531
      %v1533 = vpop.f32.mrb[0].mxu0
      %1534 = vdwg.mxu0
      %v1535 = vadd.f32 %v1293, %v1532
      %v1536 = vld [vmem:[%s5] sm:$0x1]
      %v1538 = vlaneseq
      %v1539 = vshrl.u32 %v1538, 7
      %v1540 = vsub.s32 0, %v1539
      %v1541 = vrot.slane %v1536, %v1540
      %v1543 = vadd.f32 %v1535, %v1541
      %v1544 = vadd.f32 %v1543, %v477
      %v1545 = vld [vmem:[%s6] sm:$0x1]
      %v1546 = vld [vmem:[%s7] sm:$0x1]
      %v1547 = vsel %vm490, %v1544, 0.0
      %1548 = vadd.xlane.f32.xlu0 %v1547
      %v1549 = vpop.xlane.xlu0 %1548
      %v1550 = vrcp.pop 32.0
      %v1551 = vmul.f32 %v1549, %v1550
      %v1552 = vsub.f32 %v1544, %v1551
      %v1553 = vmul.f32 %v1552, %v1552
      %v1554 = vsel %vm490, %v1553, 0.0
      %1555 = vadd.xlane.f32.xlu0 %v1554
      %v1556 = vpop.xlane.xlu0 %1555
      %v1557 = vmul.f32 %v1556, %v1550
      %v1558 = vadd.f32 %v1557, 1e-12
      %v1559 = vrsqrt.pop %v1558
      %v1560 = vmul.f32 %v1552, %v1559
      %v1562 = vlaneseq
      %v1563 = vshrl.u32 %v1562, 7
      %v1564 = vsub.s32 0, %v1563
      %v1565 = vrot.slane %v1545, %v1564
      %v1567 = vmul.f32 %v1560, %v1565
      %v1569 = vlaneseq
      %v1570 = vshrl.u32 %v1569, 7
      %v1571 = vsub.s32 0, %v1570
      %v1572 = vrot.slane %v1546, %v1571
      %v1574 = vadd.f32 %v1567, %v1572
      %v1575 = vld [vmem:[%s8] sm:$0xff]
      %v1576 = vld [vmem:[%s8 + $0x8] sm:$0xff]
      %v1577 = vld [vmem:[%s8 + $0x10] sm:$0xff]
      %v1578 = vld [vmem:[%s8 + $0x18] sm:$0xff]
      %v1579 = vld [vmem:[%s9] sm:$0x1]
      %v1581 = vlaneseq
      %v1582 = vshrl.u32 %v1581, 7
      %v1583 = vsub.s32 0, %v1582
      %v1584 = vrot.slane %v1579, %v1583
      %v1587 = vsel %vm490, %v1574, 0
      %1589 = vmatprep.subr.mxu0 0.0
      %1590 = vmatpush1.msra.mxu0 %v1575
      %1591 = vmatprep.subr.mxu0 0.0
      %1592 = vmatpush1.msra.mxu0 %v1576
      %1593 = vmatprep.subr.mxu0 0.0
      %1594 = vmatpush1.msra.mxu0 %v1577
      %1595 = vmatprep.subr.mxu0 0.0
      %1596 = vmatpush1.msra.mxu0 %v1578
      %1597 = vmatprep.subr.mxu0 0.0
      %1598 = vmatpush1.msra.mxu0 0.0
      %1599 = vmatprep.subr.mxu0 0.0
      %1600 = vmatpush1.msra.mxu0 0.0
      %1601 = vmatprep.subr.mxu0 0.0
      %1602 = vmatpush1.msra.mxu0 0.0
      %1603 = vmatprep.subr.mxu0 0.0
      %1604 = vmatpush1.msra.mxu0 0.0
      %1605 = vmatprep.subr.mxu0 0.0
      %1606 = vmatpush1.msra.mxu0 0.0
      %1607 = vmatprep.subr.mxu0 0.0
      %1608 = vmatpush1.msra.mxu0 0.0
      %1609 = vmatprep.subr.mxu0 0.0
      %1610 = vmatpush1.msra.mxu0 0.0
      %1611 = vmatprep.subr.mxu0 0.0
      %1612 = vmatpush1.msra.mxu0 0.0
      %1613 = vmatprep.subr.mxu0 0.0
      %1614 = vmatpush1.msra.mxu0 0.0
      %1615 = vmatprep.subr.mxu0 0.0
      %1616 = vmatpush1.msra.mxu0 0.0
      %1617 = vmatprep.subr.mxu0 0.0
      %1618 = vmatpush1.msra.mxu0 0.0
      %1619 = vmatprep.subr.mxu0 0.0
      %1620 = vmatpush1.msra.mxu0 0.0
      %1621 = vmatprep.subr.mxu0 0.0
      %1622 = vmatpush1.msra.mxu0 0.0
      %1623 = vmatprep.subr.mxu0 0.0
      %1624 = vmatpush1.msra.mxu0 0.0
      %1625 = vmatprep.subr.mxu0 0.0
      %1626 = vmatpush1.msra.mxu0 0.0
      %1627 = vmatprep.subr.mxu0 0.0
      %1628 = vmatpush1.msra.mxu0 0.0
      %1629 = vmatprep.subr.mxu0 0.0
      %1630 = vmatpush1.msra.mxu0 0.0
      %1631 = vmatprep.subr.mxu0 0.0
      %1632 = vmatpush1.msra.mxu0 0.0
      %1633 = vmatprep.subr.mxu0 0.0
      %1634 = vmatpush1.msra.mxu0 0.0
      %1635 = vmatprep.subr.mxu0 0.0
      %1636 = vmatpush1.msra.mxu0 0.0
      %1637 = vmatprep.subr.mxu0 0.0
      %1638 = vmatpush1.msra.mxu0 0.0
      %1639 = vmatprep.subr.mxu0 0.0
      %1640 = vmatpush1.msra.mxu0 0.0
      %1641 = vmatprep.subr.mxu0 0.0
      %1642 = vmatpush1.msra.mxu0 0.0
      %1643 = vmatprep.subr.mxu0 0.0
      %1644 = vmatpush1.msra.mxu0 0.0
      %1645 = vmatprep.subr.mxu0 0.0
      %1646 = vmatpush1.msra.mxu0 0.0
      %1647 = vmatprep.subr.mxu0 0.0
      %1648 = vmatpush1.msra.mxu0 0.0
      %1649 = vmatprep.subr.mxu0 0.0
      %1650 = vmatpush1.msra.mxu0 0.0
      %1651 = vmatprep.subr.mxu0 0.0
      %1652 = vmatpush1.msra.mxu0 0.0
      %1653 = vmatprep.mubr.f32.mxu0 0.0
      %1654 = vmatmul.mubr.f32.gmra.mrb[0].mxu0 %v1587
      %v1655 = vpop.f32.mrb[0].mxu0
      %v1656 = vadd.f32 %v1584, %v1655
      %v1657 = vpop.f32.mrb[0].mxu0
      %1658 = vdwg.mxu0
      %v1659 = vmul.f32 %v1656, 0.5
      %v1660 = vmul.f32 %v1656, 0.044715
      %v1661 = vmul.f32 %v1660, %v1656
      %v1662 = vmul.f32 %v1661, %v1656
      %v1663 = vadd.f32 %v1656, %v1662
      %v1664 = vmul.f32 %v1663, 0.7978846
      %v1665 = vtanh.pop %v1664
      %v1666 = vadd.f32 %v1665, 1.0
      %v1667 = vmul.f32 %v1659, %v1666
      %v1668 = vld [vmem:[%s10] sm:$0xff]
      %v1669 = vld [vmem:[%s10 + $0x8] sm:$0xff]
      %v1670 = vld [vmem:[%s10 + $0x10] sm:$0xff]
      %v1671 = vld [vmem:[%s10 + $0x18] sm:$0xff]
      %v1672 = vld [vmem:[%s10 + $0x20] sm:$0xff]
      %v1673 = vld [vmem:[%s10 + $0x28] sm:$0xff]
      %v1674 = vld [vmem:[%s10 + $0x30] sm:$0xff]
      %v1675 = vld [vmem:[%s10 + $0x38] sm:$0xff]
      %v1676 = vld [vmem:[%s11] sm:$0x1]
      %v1678 = vlaneseq
      %v1679 = vshrl.u32 %v1678, 7
      %v1680 = vsub.s32 0, %v1679
      %v1681 = vrot.slane %v1676, %v1680
      %vm1683 = vcmask 523264
      %v1685 = vsel %vm1683, %v1667, 0
      %1687 = vmatprep.subr.mxu0 0.0
      %1688 = vmatpush1.msra.mxu0 %v1668
      %1689 = vmatprep.subr.mxu0 0.0
      %1690 = vmatpush1.msra.mxu0 %v1669
      %1691 = vmatprep.subr.mxu0 0.0
      %1692 = vmatpush1.msra.mxu0 %v1670
      %1693 = vmatprep.subr.mxu0 0.0
      %1694 = vmatpush1.msra.mxu0 %v1671
      %1695 = vmatprep.subr.mxu0 0.0
      %1696 = vmatpush1.msra.mxu0 %v1672
      %1697 = vmatprep.subr.mxu0 0.0
      %1698 = vmatpush1.msra.mxu0 %v1673
      %1699 = vmatprep.subr.mxu0 0.0
      %1700 = vmatpush1.msra.mxu0 %v1674
      %1701 = vmatprep.subr.mxu0 0.0
      %1702 = vmatpush1.msra.mxu0 %v1675
      %1703 = vmatprep.subr.mxu0 0.0
      %1704 = vmatpush1.msra.mxu0 0.0
      %1705 = vmatprep.subr.mxu0 0.0
      %1706 = vmatpush1.msra.mxu0 0.0
      %1707 = vmatprep.subr.mxu0 0.0
      %1708 = vmatpush1.msra.mxu0 0.0
      %1709 = vmatprep.subr.mxu0 0.0
      %1710 = vmatpush1.msra.mxu0 0.0
      %1711 = vmatprep.subr.mxu0 0.0
      %1712 = vmatpush1.msra.mxu0 0.0
      %1713 = vmatprep.subr.mxu0 0.0
      %1714 = vmatpush1.msra.mxu0 0.0
      %1715 = vmatprep.subr.mxu0 0.0
      %1716 = vmatpush1.msra.mxu0 0.0
      %1717 = vmatprep.subr.mxu0 0.0
      %1718 = vmatpush1.msra.mxu0 0.0
      %1719 = vmatprep.subr.mxu0 0.0
      %1720 = vmatpush1.msra.mxu0 0.0
      %1721 = vmatprep.subr.mxu0 0.0
      %1722 = vmatpush1.msra.mxu0 0.0
      %1723 = vmatprep.subr.mxu0 0.0
      %1724 = vmatpush1.msra.mxu0 0.0
      %1725 = vmatprep.subr.mxu0 0.0
      %1726 = vmatpush1.msra.mxu0 0.0
      %1727 = vmatprep.subr.mxu0 0.0
      %1728 = vmatpush1.msra.mxu0 0.0
      %1729 = vmatprep.subr.mxu0 0.0
      %1730 = vmatpush1.msra.mxu0 0.0
      %1731 = vmatprep.subr.mxu0 0.0
      %1732 = vmatpush1.msra.mxu0 0.0
      %1733 = vmatprep.subr.mxu0 0.0
      %1734 = vmatpush1.msra.mxu0 0.0
      %1735 = vmatprep.subr.mxu0 0.0
      %1736 = vmatpush1.msra.mxu0 0.0
      %1737 = vmatprep.subr.mxu0 0.0
      %1738 = vmatpush1.msra.mxu0 0.0
      %1739 = vmatprep.subr.mxu0 0.0
      %1740 = vmatpush1.msra.mxu0 0.0
      %1741 = vmatprep.subr.mxu0 0.0
      %1742 = vmatpush1.msra.mxu0 0.0
      %1743 = vmatprep.subr.mxu0 0.0
      %1744 = vmatpush1.msra.mxu0 0.0
      %1745 = vmatprep.subr.mxu0 0.0
      %1746 = vmatpush1.msra.mxu0 0.0
      %1747 = vmatprep.subr.mxu0 0.0
      %1748 = vmatpush1.msra.mxu0 0.0
      %1749 = vmatprep.subr.mxu0 0.0
      %1750 = vmatpush1.msra.mxu0 0.0
      %1751 = vmatprep.mubr.f32.mxu0 0.0
      %1752 = vmatmul.mubr.f32.gmra.mrb[0].mxu0 %v1685
      %v1753 = vpop.f32.mrb[0].mxu0
      %v1754 = vadd.f32 %v1681, %v1753
      %v1755 = vpop.f32.mrb[0].mxu0
      %1756 = vdwg.mxu0
      %v1757 = vadd.f32 %v1754, %v1574
      %v1758 = vld [vmem:[%s12] sm:$0x1]
      %v1759 = vld [vmem:[%s13] sm:$0x1]
      %v1760 = vsel %vm490, %v1757, 0.0
      %1761 = vadd.xlane.f32.xlu0 %v1760
      %v1762 = vpop.xlane.xlu0 %1761
      %v1763 = vmul.f32 %v1762, %v1550
      %v1764 = vsub.f32 %v1757, %v1763
      %v1765 = vmul.f32 %v1764, %v1764
      %v1766 = vsel %vm490, %v1765, 0.0
      %1767 = vadd.xlane.f32.xlu0 %v1766
      %v1768 = vpop.xlane.xlu0 %1767
      %v1769 = vmul.f32 %v1768, %v1550
      %v1770 = vadd.f32 %v1769, 1e-12
      %v1771 = vrsqrt.pop %v1770
      %v1772 = vmul.f32 %v1764, %v1771
      %v1774 = vlaneseq
      %v1775 = vshrl.u32 %v1774, 7
      %v1776 = vsub.s32 0, %v1775
      %v1777 = vrot.slane %v1758, %v1776
      %v1779 = vmul.f32 %v1772, %v1777
      %v1781 = vlaneseq
      %v1782 = vshrl.u32 %v1781, 7
      %v1783 = vsub.s32 0, %v1782
      %v1784 = vrot.slane %v1759, %v1783
      %v1786 = vadd.f32 %v1779, %v1784
      %1787 = vst.msk [vmem:[%s476] sm:$0xff] %vm490, %v1786
      %p1788 = scmp.lt.s32.totalorder %s25, 1
      %s1789 = scalar_select %p1788, %s25, 1
      %s1790 = smul.addr %s1789, 8
      %s1791 = scalar_lea.vmem %s14, %s1790
      // Predicated region
      $region77: #{forward.5} parent=75 // pred_check
        %p1792 = pneg %p347
      $region78: #{forward.5} parent=75 // pred_check_branch
        %1794 = sbr.rel (%p1792) target = $region80
      $region79: #{forward.5} parent=75 // pred_region
        _
      $region80: #{forward.5} parent=75 // pred_fallthru
        _
    $region76: #{forward.5} parent=5 // pred_fallthru
      _
    %p1795 = scmp.le.s32.totalorder 2, %s20
    // Predicated region
    $region81: #{forward.5} parent=5 // pred_check
      %p1796 = pneg %p1795
    $region82: #{forward.5} parent=5 // pred_check_branch
      %1798 = sbr.rel (%p1796) target = $region84
    $region83: #{forward.5} parent=5 // pred_region
      %s1799 = ssub.s32 %s20, 2
      // Predicated region
      $region85: #{forward.5} parent=83 // pred_check
        %p1800 = pneg %p353
      $region86: #{forward.5} parent=83 // pred_check_branch
        %1802 = sbr.rel (%p1800) target = $region88
      $region87: #{forward.5} parent=83 // pred_region
        %p1803 = scmp.lt.s32.totalorder %s26, 1
        %s1804 = scalar_select %p1803, %s26, 1
        %s1805 = smul.addr %s1804, 8
        %s1806 = scalar_lea.vmem %s14, %s1805
      $region88: #{forward.5} parent=83 // pred_fallthru
        _
    $region84: #{forward.5} parent=5 // pred_fallthru
      _
  $region6: #{forward.5} parent=0 // loop_footer
    %s24 = sadd.s32 1, %s20
  $region7: #{forward.5} parent=0 // loop_footer_branch
    %19 = sbr.rel target = $region3
  $region8: #{forward.5} parent=0 // loop_exit
    _

</llo_original>
